<compile_context>
chip_gen: v6e
topology: v6e:2x2x1
jax: 0.10.0
libtpu: 0.0.40
codegen_flags: <defaults>
</compile_context>

<pallas_src>
import functools
import math

import jax
import jax.numpy as jnp
from jax.experimental import pallas as pl
from jax.experimental.pallas import tpu as pltpu  # noqa: F401  (TPU backend)


# ----------------------------- kernel helpers ------------------------------

def _layernorm(x, g, b, eps=1e-5):
    mu = jnp.mean(x, axis=-1, keepdims=True)
    var = jnp.mean((x - mu) ** 2, axis=-1, keepdims=True)
    return (x - mu) * jax.lax.rsqrt(var + eps) * g + b


# --------------------------- fully fused kernel -----------------------------

def fused_lm_kernel(x_ref, bias_ref, hmask_ref,
                    ln1_g_ref, ln1_b_ref, wqkv_ref, bqkv_ref,
                    wo_ref, bo_ref, ln2_g_ref, ln2_b_ref,
                    w1_ref, b1_ref, w2_ref, b2_ref,
                    dec_g_ref, dec_b_ref, et_ref, vmask_ref,
                    out_ref,
                    *, num_layers, num_heads, head_dim, inv_temp):
    bf16 = jnp.bfloat16
    Dh = num_heads * head_dim
    scale = 1.0 / math.sqrt(head_dim)

    x = x_ref[...]                                   # (NS, D) f32, VMEM-resident
    NS = x.shape[0]

    # Constants loaded / computed once (hoisted out of the layer loop).
    attn_bias = bias_ref[...]                        # (NS, NS) f32: 0 / -1e30
    head_masks = [hmask_ref[h] for h in range(num_heads)]  # each (1, Dh) f32

    for li in range(num_layers):
        # ---- attention sublayer (pre-LN, causal, block-diagonal batch) ----
        h = _layernorm(x, ln1_g_ref[li], ln1_b_ref[li])
        qkv = jnp.dot(h.astype(bf16), wqkv_ref[li],
                      preferred_element_type=jnp.float32) + bqkv_ref[li]
        q = qkv[:, 0 * Dh:1 * Dh] * scale            # (NS, Dh) f32
        kb = qkv[:, 1 * Dh:2 * Dh].astype(bf16)      # (NS, Dh) bf16
        vb = qkv[:, 2 * Dh:3 * Dh].astype(bf16)      # (NS, Dh) bf16

        attn = jnp.zeros((NS, Dh), jnp.float32)
        for hd in range(num_heads):
            # Zero out the other heads' lanes of q so the full-Dh contraction
            # equals the per-head dot product (no lane slicing / concat).
            qh = (q * head_masks[hd]).astype(bf16)
            s = jax.lax.dot_general(qh, kb, (((1,), (1,)), ((), ())),
                                    preferred_element_type=jnp.float32)
            s = s + attn_bias                        # causal + same-batch mask
            s = s - jnp.max(s, axis=-1, keepdims=True)
            p = jnp.exp(s)
            p = p * pl.reciprocal(jnp.sum(p, axis=-1, keepdims=True),
                                  approx=True)
            o = jnp.dot(p.astype(bf16), vb,
                        preferred_element_type=jnp.float32)
            attn = attn + o * head_masks[hd]         # keep only this head's lanes

        x = x + jnp.dot(attn.astype(bf16), wo_ref[li],
                        preferred_element_type=jnp.float32) + bo_ref[li]

        # ---- feed-forward sublayer (pre-LN) -------------------------------
        h2 = _layernorm(x, ln2_g_ref[li], ln2_b_ref[li])
        f = jnp.dot(h2.astype(bf16), w1_ref[li],
                    preferred_element_type=jnp.float32) + b1_ref[li]
        f = jax.nn.gelu(f, approximate=True)
        f = jnp.dot(f.astype(bf16), w2_ref[li],
                    preferred_element_type=jnp.float32) + b2_ref[li]
        x = x + f

    # ---- decode: LayerNorm + tied-embedding logits + softmax ---------------
    hdec = _layernorm(x, dec_g_ref[...], dec_b_ref[...])
    logits = jnp.dot(hdec.astype(bf16), et_ref[...],
                     preferred_element_type=jnp.float32) * inv_temp
    logits = logits - jnp.max(logits, axis=-1, keepdims=True)
    e = jnp.exp(logits) * vmask_ref[...]             # zero padded vocab lanes
    out_ref[...] = e / jnp.sum(e, axis=-1, keepdims=True)   # lane-dense (NS, Vp)


# ------------------------- parameter packing (one-time) ---------------------

def pack_params(params, cfg):
    """Stack per-layer weights along a leading layer axis and cast MXU operands
    to bf16; precompute the padded embedding transpose and static masks."""
    bf16 = jnp.bfloat16
    layers = params["layers"]
    H = cfg["num_attention_heads"]
    Hd = cfg["head_embedding_dim"]
    Dh = H * Hd
    V, D = params["emb"].shape
    Vp = ((V + 127) // 128) * 128                    # lane-dense output width

    packed = {
        "ln1_g": jnp.stack([p["ln1_g"] for p in layers]),
        "ln1_b": jnp.stack([p["ln1_b"] for p in layers]),
        "wqkv": jnp.stack([jnp.concatenate([p["wq"], p["wk"], p["wv"]], axis=1)
                           for p in layers]).astype(bf16),          # (Lyr, D, 3Dh)
        "bqkv": jnp.stack([jnp.concatenate([p["bq"], p["bk"], p["bv"]], axis=1)
                           for p in layers]),                        # (Lyr, 1, 3Dh)
        "wo": jnp.stack([p["wo"] for p in layers]).astype(bf16),
        "bo": jnp.stack([p["bo"] for p in layers]),
        "ln2_g": jnp.stack([p["ln2_g"] for p in layers]),
        "ln2_b": jnp.stack([p["ln2_b"] for p in layers]),
        "w1": jnp.stack([p["w1"] for p in layers]).astype(bf16),
        "b1": jnp.stack([p["b1"] for p in layers]),
        "w2": jnp.stack([p["w2"] for p in layers]).astype(bf16),
        "b2": jnp.stack([p["b2"] for p in layers]),
    }

    # Tied-embedding decode matrix, transposed and padded to 128 lanes.
    et = jnp.zeros((D, Vp), jnp.float32).at[:, :V].set(params["emb"].T)
    packed["et"] = et.astype(bf16)
    packed["vocab_mask"] = (jnp.arange(Vp) < V).astype(jnp.float32).reshape(1, Vp)

    # Per-head lane masks (head on a leading axis, lanes untouched).
    lane = jnp.arange(Dh)
    packed["head_mask"] = jnp.stack(
        [(lane // Hd == h).astype(jnp.float32).reshape(1, Dh) for h in range(H)])

    packed["vpad"] = Vp
    return packed


# ------------------------------ full model ---------------------------------

def language_model_forward(token_ids, params, packed, cfg):
    """Eval-mode forward: returns softmax next-token distribution (N, L+1, V)."""
    N, L = token_ids.shape
    D = cfg["embedding_dim"]
    S = L + 1
    max_tok = cfg["max_token_value"]
    V = max_tok + 1
    Vp = packed["vpad"]

    # fetch_embeddings (gather glue kept in plain JAX)
    cleaned = jnp.where(token_ids != -1, token_ids, max_tok)
    text_emb = params["emb"][cleaned] + params["pos"][None, :, :]       # (N, L, D)
    start = jnp.broadcast_to(params["start_tok"].reshape(1, 1, D), (N, 1, D))
    x = jnp.concatenate([start, text_emb], axis=1)                      # (N, S, D)
    x_flat = x.reshape(N * S, D)                                        # rows on sublanes

    # Block-diagonal (same batch) AND causal additive bias, computed once.
    r = jnp.arange(N * S)
    same_batch = (r[:, None] // S) == (r[None, :] // S)
    causal = (r[None, :] % S) <= (r[:, None] % S)
    attn_bias = jnp.where(same_batch & causal, 0.0, -1e30).astype(jnp.float32)

    kernel = functools.partial(
        fused_lm_kernel,
        num_layers=cfg["num_transformer_layers"],
        num_heads=cfg["num_attention_heads"],
        head_dim=cfg["head_embedding_dim"],
        inv_temp=1.0 / cfg["temperature"])

    probs_padded = pl.pallas_call(
        kernel,
        out_shape=jax.ShapeDtypeStruct((N * S, Vp), jnp.float32),
    )(x_flat, attn_bias, packed["head_mask"],
      packed["ln1_g"], packed["ln1_b"], packed["wqkv"], packed["bqkv"],
      packed["wo"], packed["bo"], packed["ln2_g"], packed["ln2_b"],
      packed["w1"], packed["b1"], packed["w2"], packed["b2"],
      params["dec_ln_g"], params["dec_ln_b"], packed["et"],
      packed["vocab_mask"])

    return probs_padded.reshape(N, S, Vp)[:, :, :V]


# ------------------------------- main --------------------------------------

if __name__ == "__main__":
    cfg = dict(
        num_transformer_layers=2,
        num_attention_heads=2,
        context_length=8,
        embedding_dim=32,
        head_embedding_dim=16,
        max_token_value=63,      # tokenizer.max_token_value -> vocab = 64
        temperature=1.0,
    )
    N = 2
    D = cfg["embedding_dim"]
    L = cfg["context_length"]
    H = cfg["num_attention_heads"]
    Hd = cfg["head_embedding_dim"]
    Dh = H * Hd
    V = cfg["max_token_value"] + 1
    F4 = 4 * D

    key = jax.random.PRNGKey(0)
    ks = iter(jax.random.split(key, 64))

    def nrm(shape, scale=0.02):
        return (scale * jax.random.normal(next(ks), shape)).astype(jnp.float32)

    params = {
        "emb": jax.random.normal(next(ks), (V, D)).astype(jnp.float32),
        "pos": jax.random.normal(next(ks), (L, D)).astype(jnp.float32),
        "start_tok": jax.random.normal(next(ks), (1, D)).astype(jnp.float32),
        "dec_ln_g": jnp.ones((1, D), jnp.float32),
        "dec_ln_b": jnp.zeros((1, D), jnp.float32),
        "layers": [],
    }
    for _ in range(cfg["num_transformer_layers"]):
        params["layers"].append({
            "ln1_g": jnp.ones((1, D), jnp.float32),
            "ln1_b": jnp.zeros((1, D), jnp.float32),
            "wq": nrm((D, Dh)), "bq": jnp.zeros((1, Dh), jnp.float32),
            "wk": nrm((D, Dh)), "bk": jnp.zeros((1, Dh), jnp.float32),
            "wv": nrm((D, Dh)), "bv": jnp.zeros((1, Dh), jnp.float32),
            "wo": nrm((Dh, D)), "bo": jnp.zeros((1, D), jnp.float32),
            "ln2_g": jnp.ones((1, D), jnp.float32),
            "ln2_b": jnp.zeros((1, D), jnp.float32),
            "w1": nrm((D, F4)), "b1": jnp.zeros((1, F4), jnp.float32),
            "w2": nrm((F4, D)), "b2": jnp.zeros((1, D), jnp.float32),
        })

    token_ids = jax.random.randint(next(ks), (N, L), 0, V, dtype=jnp.int32)
    token_ids = token_ids.at[0, 3].set(-1)   # exercise the ignore-index path

    packed = pack_params(params, cfg)        # one-time weight packing / bf16 cast

    out = language_model_forward(token_ids, params, packed, cfg)
    out = jax.block_until_ready(out)

    assert out.shape == (N, L + 1, V), out.shape
    assert bool(jnp.all(jnp.isfinite(out)))
    assert bool(jnp.allclose(jnp.sum(out, axis=-1), 1.0, atol=1e-4))
    print("KERNEL_OK")
</pallas_src>

<mosaic_0001>
module attributes {stable_mosaic.version = 11 : i64} {
  func.func @fused_lm_kernel(%arg0: memref<18x32xf32, #tpu.memory_space<vmem>>, %arg1: memref<18x18xf32, #tpu.memory_space<vmem>>, %arg2: memref<2x1x32xf32, #tpu.memory_space<vmem>>, %arg3: memref<2x1x32xf32, #tpu.memory_space<vmem>>, %arg4: memref<2x1x32xf32, #tpu.memory_space<vmem>>, %arg5: memref<2x32x96xbf16, #tpu.memory_space<vmem>>, %arg6: memref<2x1x96xf32, #tpu.memory_space<vmem>>, %arg7: memref<2x32x32xbf16, #tpu.memory_space<vmem>>, %arg8: memref<2x1x32xf32, #tpu.memory_space<vmem>>, %arg9: memref<2x1x32xf32, #tpu.memory_space<vmem>>, %arg10: memref<2x1x32xf32, #tpu.memory_space<vmem>>, %arg11: memref<2x32x128xbf16, #tpu.memory_space<vmem>>, %arg12: memref<2x1x128xf32, #tpu.memory_space<vmem>>, %arg13: memref<2x128x32xbf16, #tpu.memory_space<vmem>>, %arg14: memref<2x1x32xf32, #tpu.memory_space<vmem>>, %arg15: memref<1x32xf32, #tpu.memory_space<vmem>>, %arg16: memref<1x32xf32, #tpu.memory_space<vmem>>, %arg17: memref<32x128xbf16, #tpu.memory_space<vmem>>, %arg18: memref<1x128xf32, #tpu.memory_space<vmem>>, %arg19: memref<18x128xf32, #tpu.memory_space<vmem>>) attributes {dimension_semantics = [], scalar_prefetch = 0 : i64, scratch_operands = 0 : i64, tpu.core_type = #tpu.core_type<tc>} {
    %c0 = arith.constant 0 : index
    %c0_0 = arith.constant 0 : index
    %0 = vector.load %arg0[%c0, %c0_0] : memref<18x32xf32, #tpu.memory_space<vmem>>, vector<18x32xf32>
    %c0_1 = arith.constant 0 : index
    %c0_2 = arith.constant 0 : index
    %1 = vector.load %arg1[%c0_1, %c0_2] : memref<18x18xf32, #tpu.memory_space<vmem>>, vector<18x18xf32>
    %c0_3 = arith.constant 0 : index
    %c0_4 = arith.constant 0 : index
    %c0_5 = arith.constant 0 : index
    %2 = vector.load %arg2[%c0_3, %c0_4, %c0_5] : memref<2x1x32xf32, #tpu.memory_space<vmem>>, vector<1x1x32xf32>
    %3 = vector.shape_cast %2 : vector<1x1x32xf32> to vector<1x32xf32>
    %c1 = arith.constant 1 : index
    %c0_6 = arith.constant 0 : index
    %c0_7 = arith.constant 0 : index
    %4 = vector.load %arg2[%c1, %c0_6, %c0_7] : memref<2x1x32xf32, #tpu.memory_space<vmem>>, vector<1x1x32xf32>
    %5 = vector.shape_cast %4 : vector<1x1x32xf32> to vector<1x32xf32>
    %c0_8 = arith.constant 0 : index
    %c0_9 = arith.constant 0 : index
    %c0_10 = arith.constant 0 : index
    %6 = vector.load %arg3[%c0_8, %c0_9, %c0_10] : memref<2x1x32xf32, #tpu.memory_space<vmem>>, vector<1x1x32xf32>
    %7 = vector.shape_cast %6 : vector<1x1x32xf32> to vector<1x32xf32>
    %c0_11 = arith.constant 0 : index
    %c0_12 = arith.constant 0 : index
    %c0_13 = arith.constant 0 : index
    %8 = vector.load %arg4[%c0_11, %c0_12, %c0_13] : memref<2x1x32xf32, #tpu.memory_space<vmem>>, vector<1x1x32xf32>
    %9 = vector.shape_cast %8 : vector<1x1x32xf32> to vector<1x32xf32>
    %cst = arith.constant dense<0.000000e+00> : vector<18xf32>
    %10 = vector.multi_reduction <add>, %0, %cst [1] : vector<18x32xf32> to vector<18xf32>
    %11 = vector.shape_cast %10 : vector<18xf32> to vector<18x1xf32>
    %cst_14 = arith.constant 3.200000e+01 : f32
    %12 = vector.broadcast %cst_14 : f32 to vector<18x1xf32>
    %13 = arith.divf %11, %12 : vector<18x1xf32>
    %14 = vector.broadcast %13 : vector<18x1xf32> to vector<18x32xf32>
    %15 = arith.subf %0, %14 : vector<18x32xf32>
    %16 = arith.mulf %15, %15 : vector<18x32xf32>
    %cst_15 = arith.constant dense<0.000000e+00> : vector<18xf32>
    %17 = vector.multi_reduction <add>, %16, %cst_15 [1] : vector<18x32xf32> to vector<18xf32>
    %18 = vector.shape_cast %17 : vector<18xf32> to vector<18x1xf32>
    %cst_16 = arith.constant 3.200000e+01 : f32
    %19 = vector.broadcast %cst_16 : f32 to vector<18x1xf32>
    %20 = arith.divf %18, %19 : vector<18x1xf32>
    %21 = vector.broadcast %13 : vector<18x1xf32> to vector<18x32xf32>
    %22 = arith.subf %0, %21 : vector<18x32xf32>
    %cst_17 = arith.constant 9.99999974E-6 : f32
    %23 = vector.broadcast %cst_17 : f32 to vector<18x1xf32>
    %24 = arith.addf %20, %23 : vector<18x1xf32>
    %25 = math.rsqrt %24 : vector<18x1xf32>
    %26 = vector.broadcast %25 : vector<18x1xf32> to vector<18x32xf32>
    %27 = arith.mulf %22, %26 : vector<18x32xf32>
    %28 = vector.broadcast %7 : vector<1x32xf32> to vector<18x32xf32>
    %29 = arith.mulf %27, %28 : vector<18x32xf32>
    %30 = vector.broadcast %9 : vector<1x32xf32> to vector<18x32xf32>
    %31 = arith.addf %29, %30 : vector<18x32xf32>
    %32 = arith.truncf %31 : vector<18x32xf32> to vector<18x32xbf16>
    %c0_18 = arith.constant 0 : index
    %c0_19 = arith.constant 0 : index
    %c0_20 = arith.constant 0 : index
    %33 = vector.load %arg5[%c0_18, %c0_19, %c0_20] : memref<2x32x96xbf16, #tpu.memory_space<vmem>>, vector<1x32x96xbf16>
    %34 = vector.shape_cast %33 : vector<1x32x96xbf16> to vector<32x96xbf16>
    %cst_21 = arith.constant dense<0.000000e+00> : vector<18x96xf32>
    %35 = tpu.matmul %32, %34, %cst_21 {dimension_numbers = #tpu.dot_dimension_numbers<[1], [0], [0], [1], [0, 0, 1, 1], [], []>} : vector<18x32xbf16>, vector<32x96xbf16>, vector<18x96xf32> -> vector<18x96xf32>
    %c0_22 = arith.constant 0 : index
    %c0_23 = arith.constant 0 : index
    %c0_24 = arith.constant 0 : index
    %36 = vector.load %arg6[%c0_22, %c0_23, %c0_24] : memref<2x1x96xf32, #tpu.memory_space<vmem>>, vector<1x1x96xf32>
    %37 = vector.shape_cast %36 : vector<1x1x96xf32> to vector<1x96xf32>
    %38 = vector.broadcast %37 : vector<1x96xf32> to vector<18x96xf32>
    %39 = arith.addf %35, %38 : vector<18x96xf32>
    %40 = vector.extract_strided_slice %39 {offsets = [0, 0], sizes = [18, 32], strides = [1, 1]} : vector<18x96xf32> to vector<18x32xf32>
    %cst_25 = arith.constant 2.500000e-01 : f32
    %41 = vector.broadcast %cst_25 : f32 to vector<18x32xf32>
    %42 = arith.mulf %40, %41 : vector<18x32xf32>
    %43 = vector.extract_strided_slice %39 {offsets = [0, 32], sizes = [18, 32], strides = [1, 1]} : vector<18x96xf32> to vector<18x32xf32>
    %44 = arith.truncf %43 : vector<18x32xf32> to vector<18x32xbf16>
    %45 = vector.extract_strided_slice %39 {offsets = [0, 64], sizes = [18, 32], strides = [1, 1]} : vector<18x96xf32> to vector<18x32xf32>
    %46 = arith.truncf %45 : vector<18x32xf32> to vector<18x32xbf16>
    %cst_26 = arith.constant 0.000000e+00 : f32
    %47 = vector.broadcast %cst_26 : f32 to vector<18x32xf32>
    %48 = vector.broadcast %3 : vector<1x32xf32> to vector<18x32xf32>
    %49 = arith.mulf %42, %48 : vector<18x32xf32>
    %50 = arith.truncf %49 : vector<18x32xf32> to vector<18x32xbf16>
    %cst_27 = arith.constant dense<0.000000e+00> : vector<18x18xf32>
    %51 = tpu.matmul %50, %44, %cst_27 {dimension_numbers = #tpu.dot_dimension_numbers<[1], [1], [0], [0], [0, 0, 1, 0], [], []>} : vector<18x32xbf16>, vector<18x32xbf16>, vector<18x18xf32> -> vector<18x18xf32>
    %52 = arith.addf %51, %1 : vector<18x18xf32>
    %cst_28 = arith.constant dense<0xFF800000> : vector<18xf32>
    %53 = vector.multi_reduction <maximumf>, %52, %cst_28 [1] : vector<18x18xf32> to vector<18xf32>
    %54 = vector.shape_cast %53 : vector<18xf32> to vector<18x1xf32>
    %55 = vector.broadcast %54 : vector<18x1xf32> to vector<18x18xf32>
    %56 = arith.subf %52, %55 : vector<18x18xf32>
    %57 = math.exp %56 : vector<18x18xf32>
    %cst_29 = arith.constant dense<0.000000e+00> : vector<18xf32>
    %58 = vector.multi_reduction <add>, %57, %cst_29 [1] : vector<18x18xf32> to vector<18xf32>
    %59 = vector.shape_cast %58 : vector<18xf32> to vector<18x1xf32>
    %60 = tpu.reciprocal %59 {approx = true} : vector<18x1xf32> -> vector<18x1xf32>
    %61 = vector.broadcast %60 : vector<18x1xf32> to vector<18x18xf32>
    %62 = arith.mulf %57, %61 : vector<18x18xf32>
    %63 = arith.truncf %62 : vector<18x18xf32> to vector<18x18xbf16>
    %cst_30 = arith.constant dense<0.000000e+00> : vector<18x32xf32>
    %64 = tpu.matmul %63, %46, %cst_30 {dimension_numbers = #tpu.dot_dimension_numbers<[1], [0], [0], [1], [0, 0, 1, 1], [], []>} : vector<18x18xbf16>, vector<18x32xbf16>, vector<18x32xf32> -> vector<18x32xf32>
    %65 = vector.broadcast %3 : vector<1x32xf32> to vector<18x32xf32>
    %66 = arith.mulf %64, %65 : vector<18x32xf32>
    %67 = arith.addf %47, %66 : vector<18x32xf32>
    %68 = vector.broadcast %5 : vector<1x32xf32> to vector<18x32xf32>
    %69 = arith.mulf %42, %68 : vector<18x32xf32>
    %70 = arith.truncf %69 : vector<18x32xf32> to vector<18x32xbf16>
    %cst_31 = arith.constant dense<0.000000e+00> : vector<18x18xf32>
    %71 = tpu.matmul %70, %44, %cst_31 {dimension_numbers = #tpu.dot_dimension_numbers<[1], [1], [0], [0], [0, 0, 1, 0], [], []>} : vector<18x32xbf16>, vector<18x32xbf16>, vector<18x18xf32> -> vector<18x18xf32>
    %72 = arith.addf %71, %1 : vector<18x18xf32>
    %cst_32 = arith.constant dense<0xFF800000> : vector<18xf32>
    %73 = vector.multi_reduction <maximumf>, %72, %cst_32 [1] : vector<18x18xf32> to vector<18xf32>
    %74 = vector.shape_cast %73 : vector<18xf32> to vector<18x1xf32>
    %75 = vector.broadcast %74 : vector<18x1xf32> to vector<18x18xf32>
    %76 = arith.subf %72, %75 : vector<18x18xf32>
    %77 = math.exp %76 : vector<18x18xf32>
    %cst_33 = arith.constant dense<0.000000e+00> : vector<18xf32>
    %78 = vector.multi_reduction <add>, %77, %cst_33 [1] : vector<18x18xf32> to vector<18xf32>
    %79 = vector.shape_cast %78 : vector<18xf32> to vector<18x1xf32>
    %80 = tpu.reciprocal %79 {approx = true} : vector<18x1xf32> -> vector<18x1xf32>
    %81 = vector.broadcast %80 : vector<18x1xf32> to vector<18x18xf32>
    %82 = arith.mulf %77, %81 : vector<18x18xf32>
    %83 = arith.truncf %82 : vector<18x18xf32> to vector<18x18xbf16>
    %cst_34 = arith.constant dense<0.000000e+00> : vector<18x32xf32>
    %84 = tpu.matmul %83, %46, %cst_34 {dimension_numbers = #tpu.dot_dimension_numbers<[1], [0], [0], [1], [0, 0, 1, 1], [], []>} : vector<18x18xbf16>, vector<18x32xbf16>, vector<18x32xf32> -> vector<18x32xf32>
    %85 = vector.broadcast %5 : vector<1x32xf32> to vector<18x32xf32>
    %86 = arith.mulf %84, %85 : vector<18x32xf32>
    %87 = arith.addf %67, %86 : vector<18x32xf32>
    %88 = arith.truncf %87 : vector<18x32xf32> to vector<18x32xbf16>
    %c0_35 = arith.constant 0 : index
    %c0_36 = arith.constant 0 : index
    %c0_37 = arith.constant 0 : index
    %89 = vector.load %arg7[%c0_35, %c0_36, %c0_37] : memref<2x32x32xbf16, #tpu.memory_space<vmem>>, vector<1x32x32xbf16>
    %90 = vector.shape_cast %89 : vector<1x32x32xbf16> to vector<32x32xbf16>
    %cst_38 = arith.constant dense<0.000000e+00> : vector<18x32xf32>
    %91 = tpu.matmul %88, %90, %cst_38 {dimension_numbers = #tpu.dot_dimension_numbers<[1], [0], [0], [1], [0, 0, 1, 1], [], []>} : vector<18x32xbf16>, vector<32x32xbf16>, vector<18x32xf32> -> vector<18x32xf32>
    %92 = arith.addf %0, %91 : vector<18x32xf32>
    %c0_39 = arith.constant 0 : index
    %c0_40 = arith.constant 0 : index
    %c0_41 = arith.constant 0 : index
    %93 = vector.load %arg8[%c0_39, %c0_40, %c0_41] : memref<2x1x32xf32, #tpu.memory_space<vmem>>, vector<1x1x32xf32>
    %94 = vector.shape_cast %93 : vector<1x1x32xf32> to vector<1x32xf32>
    %95 = vector.broadcast %94 : vector<1x32xf32> to vector<18x32xf32>
    %96 = arith.addf %92, %95 : vector<18x32xf32>
    %c0_42 = arith.constant 0 : index
    %c0_43 = arith.constant 0 : index
    %c0_44 = arith.constant 0 : index
    %97 = vector.load %arg9[%c0_42, %c0_43, %c0_44] : memref<2x1x32xf32, #tpu.memory_space<vmem>>, vector<1x1x32xf32>
    %98 = vector.shape_cast %97 : vector<1x1x32xf32> to vector<1x32xf32>
    %c0_45 = arith.constant 0 : index
    %c0_46 = arith.constant 0 : index
    %c0_47 = arith.constant 0 : index
    %99 = vector.load %arg10[%c0_45, %c0_46, %c0_47] : memref<2x1x32xf32, #tpu.memory_space<vmem>>, vector<1x1x32xf32>
    %100 = vector.shape_cast %99 : vector<1x1x32xf32> to vector<1x32xf32>
    %cst_48 = arith.constant dense<0.000000e+00> : vector<18xf32>
    %101 = vector.multi_reduction <add>, %96, %cst_48 [1] : vector<18x32xf32> to vector<18xf32>
    %102 = vector.shape_cast %101 : vector<18xf32> to vector<18x1xf32>
    %cst_49 = arith.constant 3.200000e+01 : f32
    %103 = vector.broadcast %cst_49 : f32 to vector<18x1xf32>
    %104 = arith.divf %102, %103 : vector<18x1xf32>
    %105 = vector.broadcast %104 : vector<18x1xf32> to vector<18x32xf32>
    %106 = arith.subf %96, %105 : vector<18x32xf32>
    %107 = arith.mulf %106, %106 : vector<18x32xf32>
    %cst_50 = arith.constant dense<0.000000e+00> : vector<18xf32>
    %108 = vector.multi_reduction <add>, %107, %cst_50 [1] : vector<18x32xf32> to vector<18xf32>
    %109 = vector.shape_cast %108 : vector<18xf32> to vector<18x1xf32>
    %cst_51 = arith.constant 3.200000e+01 : f32
    %110 = vector.broadcast %cst_51 : f32 to vector<18x1xf32>
    %111 = arith.divf %109, %110 : vector<18x1xf32>
    %112 = vector.broadcast %104 : vector<18x1xf32> to vector<18x32xf32>
    %113 = arith.subf %96, %112 : vector<18x32xf32>
    %cst_52 = arith.constant 9.99999974E-6 : f32
    %114 = vector.broadcast %cst_52 : f32 to vector<18x1xf32>
    %115 = arith.addf %111, %114 : vector<18x1xf32>
    %116 = math.rsqrt %115 : vector<18x1xf32>
    %117 = vector.broadcast %116 : vector<18x1xf32> to vector<18x32xf32>
    %118 = arith.mulf %113, %117 : vector<18x32xf32>
    %119 = vector.broadcast %98 : vector<1x32xf32> to vector<18x32xf32>
    %120 = arith.mulf %118, %119 : vector<18x32xf32>
    %121 = vector.broadcast %100 : vector<1x32xf32> to vector<18x32xf32>
    %122 = arith.addf %120, %121 : vector<18x32xf32>
    %123 = arith.truncf %122 : vector<18x32xf32> to vector<18x32xbf16>
    %c0_53 = arith.constant 0 : index
    %c0_54 = arith.constant 0 : index
    %c0_55 = arith.constant 0 : index
    %124 = vector.load %arg11[%c0_53, %c0_54, %c0_55] : memref<2x32x128xbf16, #tpu.memory_space<vmem>>, vector<1x32x128xbf16>
    %125 = vector.shape_cast %124 : vector<1x32x128xbf16> to vector<32x128xbf16>
    %cst_56 = arith.constant dense<0.000000e+00> : vector<18x128xf32>
    %126 = tpu.matmul %123, %125, %cst_56 {dimension_numbers = #tpu.dot_dimension_numbers<[1], [0], [0], [1], [0, 0, 1, 1], [], []>} : vector<18x32xbf16>, vector<32x128xbf16>, vector<18x128xf32> -> vector<18x128xf32>
    %c0_57 = arith.constant 0 : index
    %c0_58 = arith.constant 0 : index
    %c0_59 = arith.constant 0 : index
    %127 = vector.load %arg12[%c0_57, %c0_58, %c0_59] : memref<2x1x128xf32, #tpu.memory_space<vmem>>, vector<1x1x128xf32>
    %128 = vector.shape_cast %127 : vector<1x1x128xf32> to vector<1x128xf32>
    %129 = vector.broadcast %128 : vector<1x128xf32> to vector<18x128xf32>
    %130 = arith.addf %126, %129 : vector<18x128xf32>
    %131 = arith.mulf %130, %130 : vector<18x128xf32>
    %132 = arith.mulf %130, %131 : vector<18x128xf32>
    %cst_60 = arith.constant 4.471500e-02 : f32
    %133 = vector.broadcast %cst_60 : f32 to vector<18x128xf32>
    %134 = arith.mulf %133, %132 : vector<18x128xf32>
    %135 = arith.addf %130, %134 : vector<18x128xf32>
    %cst_61 = arith.constant 0.797884583 : f32
    %136 = vector.broadcast %cst_61 : f32 to vector<18x128xf32>
    %137 = arith.mulf %136, %135 : vector<18x128xf32>
    %138 = math.tanh %137 : vector<18x128xf32>
    %cst_62 = arith.constant 1.000000e+00 : f32
    %139 = vector.broadcast %cst_62 : f32 to vector<18x128xf32>
    %140 = arith.addf %139, %138 : vector<18x128xf32>
    %cst_63 = arith.constant 5.000000e-01 : f32
    %141 = vector.broadcast %cst_63 : f32 to vector<18x128xf32>
    %142 = arith.mulf %141, %140 : vector<18x128xf32>
    %143 = arith.mulf %130, %142 : vector<18x128xf32>
    %144 = arith.truncf %143 : vector<18x128xf32> to vector<18x128xbf16>
    %c0_64 = arith.constant 0 : index
    %c0_65 = arith.constant 0 : index
    %c0_66 = arith.constant 0 : index
    %145 = vector.load %arg13[%c0_64, %c0_65, %c0_66] : memref<2x128x32xbf16, #tpu.memory_space<vmem>>, vector<1x128x32xbf16>
    %146 = vector.shape_cast %145 : vector<1x128x32xbf16> to vector<128x32xbf16>
    %cst_67 = arith.constant dense<0.000000e+00> : vector<18x32xf32>
    %147 = tpu.matmul %144, %146, %cst_67 {dimension_numbers = #tpu.dot_dimension_numbers<[1], [0], [0], [1], [0, 0, 1, 1], [], []>} : vector<18x128xbf16>, vector<128x32xbf16>, vector<18x32xf32> -> vector<18x32xf32>
    %c0_68 = arith.constant 0 : index
    %c0_69 = arith.constant 0 : index
    %c0_70 = arith.constant 0 : index
    %148 = vector.load %arg14[%c0_68, %c0_69, %c0_70] : memref<2x1x32xf32, #tpu.memory_space<vmem>>, vector<1x1x32xf32>
    %149 = vector.shape_cast %148 : vector<1x1x32xf32> to vector<1x32xf32>
    %150 = vector.broadcast %149 : vector<1x32xf32> to vector<18x32xf32>
    %151 = arith.addf %147, %150 : vector<18x32xf32>
    %152 = arith.addf %96, %151 : vector<18x32xf32>
    %c1_71 = arith.constant 1 : index
    %c0_72 = arith.constant 0 : index
    %c0_73 = arith.constant 0 : index
    %153 = vector.load %arg3[%c1_71, %c0_72, %c0_73] : memref<2x1x32xf32, #tpu.memory_space<vmem>>, vector<1x1x32xf32>
    %154 = vector.shape_cast %153 : vector<1x1x32xf32> to vector<1x32xf32>
    %c1_74 = arith.constant 1 : index
    %c0_75 = arith.constant 0 : index
    %c0_76 = arith.constant 0 : index
    %155 = vector.load %arg4[%c1_74, %c0_75, %c0_76] : memref<2x1x32xf32, #tpu.memory_space<vmem>>, vector<1x1x32xf32>
    %156 = vector.shape_cast %155 : vector<1x1x32xf32> to vector<1x32xf32>
    %cst_77 = arith.constant dense<0.000000e+00> : vector<18xf32>
    %157 = vector.multi_reduction <add>, %152, %cst_77 [1] : vector<18x32xf32> to vector<18xf32>
    %158 = vector.shape_cast %157 : vector<18xf32> to vector<18x1xf32>
    %cst_78 = arith.constant 3.200000e+01 : f32
    %159 = vector.broadcast %cst_78 : f32 to vector<18x1xf32>
    %160 = arith.divf %158, %159 : vector<18x1xf32>
    %161 = vector.broadcast %160 : vector<18x1xf32> to vector<18x32xf32>
    %162 = arith.subf %152, %161 : vector<18x32xf32>
    %163 = arith.mulf %162, %162 : vector<18x32xf32>
    %cst_79 = arith.constant dense<0.000000e+00> : vector<18xf32>
    %164 = vector.multi_reduction <add>, %163, %cst_79 [1] : vector<18x32xf32> to vector<18xf32>
    %165 = vector.shape_cast %164 : vector<18xf32> to vector<18x1xf32>
    %cst_80 = arith.constant 3.200000e+01 : f32
    %166 = vector.broadcast %cst_80 : f32 to vector<18x1xf32>
    %167 = arith.divf %165, %166 : vector<18x1xf32>
    %168 = vector.broadcast %160 : vector<18x1xf32> to vector<18x32xf32>
    %169 = arith.subf %152, %168 : vector<18x32xf32>
    %cst_81 = arith.constant 9.99999974E-6 : f32
    %170 = vector.broadcast %cst_81 : f32 to vector<18x1xf32>
    %171 = arith.addf %167, %170 : vector<18x1xf32>
    %172 = math.rsqrt %171 : vector<18x1xf32>
    %173 = vector.broadcast %172 : vector<18x1xf32> to vector<18x32xf32>
    %174 = arith.mulf %169, %173 : vector<18x32xf32>
    %175 = vector.broadcast %154 : vector<1x32xf32> to vector<18x32xf32>
    %176 = arith.mulf %174, %175 : vector<18x32xf32>
    %177 = vector.broadcast %156 : vector<1x32xf32> to vector<18x32xf32>
    %178 = arith.addf %176, %177 : vector<18x32xf32>
    %179 = arith.truncf %178 : vector<18x32xf32> to vector<18x32xbf16>
    %c1_82 = arith.constant 1 : index
    %c0_83 = arith.constant 0 : index
    %c0_84 = arith.constant 0 : index
    %180 = vector.load %arg5[%c1_82, %c0_83, %c0_84] : memref<2x32x96xbf16, #tpu.memory_space<vmem>>, vector<1x32x96xbf16>
    %181 = vector.shape_cast %180 : vector<1x32x96xbf16> to vector<32x96xbf16>
    %cst_85 = arith.constant dense<0.000000e+00> : vector<18x96xf32>
    %182 = tpu.matmul %179, %181, %cst_85 {dimension_numbers = #tpu.dot_dimension_numbers<[1], [0], [0], [1], [0, 0, 1, 1], [], []>} : vector<18x32xbf16>, vector<32x96xbf16>, vector<18x96xf32> -> vector<18x96xf32>
    %c1_86 = arith.constant 1 : index
    %c0_87 = arith.constant 0 : index
    %c0_88 = arith.constant 0 : index
    %183 = vector.load %arg6[%c1_86, %c0_87, %c0_88] : memref<2x1x96xf32, #tpu.memory_space<vmem>>, vector<1x1x96xf32>
    %184 = vector.shape_cast %183 : vector<1x1x96xf32> to vector<1x96xf32>
    %185 = vector.broadcast %184 : vector<1x96xf32> to vector<18x96xf32>
    %186 = arith.addf %182, %185 : vector<18x96xf32>
    %187 = vector.extract_strided_slice %186 {offsets = [0, 0], sizes = [18, 32], strides = [1, 1]} : vector<18x96xf32> to vector<18x32xf32>
    %cst_89 = arith.constant 2.500000e-01 : f32
    %188 = vector.broadcast %cst_89 : f32 to vector<18x32xf32>
    %189 = arith.mulf %187, %188 : vector<18x32xf32>
    %190 = vector.extract_strided_slice %186 {offsets = [0, 32], sizes = [18, 32], strides = [1, 1]} : vector<18x96xf32> to vector<18x32xf32>
    %191 = arith.truncf %190 : vector<18x32xf32> to vector<18x32xbf16>
    %192 = vector.extract_strided_slice %186 {offsets = [0, 64], sizes = [18, 32], strides = [1, 1]} : vector<18x96xf32> to vector<18x32xf32>
    %193 = arith.truncf %192 : vector<18x32xf32> to vector<18x32xbf16>
    %cst_90 = arith.constant 0.000000e+00 : f32
    %194 = vector.broadcast %cst_90 : f32 to vector<18x32xf32>
    %195 = vector.broadcast %3 : vector<1x32xf32> to vector<18x32xf32>
    %196 = arith.mulf %189, %195 : vector<18x32xf32>
    %197 = arith.truncf %196 : vector<18x32xf32> to vector<18x32xbf16>
    %cst_91 = arith.constant dense<0.000000e+00> : vector<18x18xf32>
    %198 = tpu.matmul %197, %191, %cst_91 {dimension_numbers = #tpu.dot_dimension_numbers<[1], [1], [0], [0], [0, 0, 1, 0], [], []>} : vector<18x32xbf16>, vector<18x32xbf16>, vector<18x18xf32> -> vector<18x18xf32>
    %199 = arith.addf %198, %1 : vector<18x18xf32>
    %cst_92 = arith.constant dense<0xFF800000> : vector<18xf32>
    %200 = vector.multi_reduction <maximumf>, %199, %cst_92 [1] : vector<18x18xf32> to vector<18xf32>
    %201 = vector.shape_cast %200 : vector<18xf32> to vector<18x1xf32>
    %202 = vector.broadcast %201 : vector<18x1xf32> to vector<18x18xf32>
    %203 = arith.subf %199, %202 : vector<18x18xf32>
    %204 = math.exp %203 : vector<18x18xf32>
    %cst_93 = arith.constant dense<0.000000e+00> : vector<18xf32>
    %205 = vector.multi_reduction <add>, %204, %cst_93 [1] : vector<18x18xf32> to vector<18xf32>
    %206 = vector.shape_cast %205 : vector<18xf32> to vector<18x1xf32>
    %207 = tpu.reciprocal %206 {approx = true} : vector<18x1xf32> -> vector<18x1xf32>
    %208 = vector.broadcast %207 : vector<18x1xf32> to vector<18x18xf32>
    %209 = arith.mulf %204, %208 : vector<18x18xf32>
    %210 = arith.truncf %209 : vector<18x18xf32> to vector<18x18xbf16>
    %cst_94 = arith.constant dense<0.000000e+00> : vector<18x32xf32>
    %211 = tpu.matmul %210, %193, %cst_94 {dimension_numbers = #tpu.dot_dimension_numbers<[1], [0], [0], [1], [0, 0, 1, 1], [], []>} : vector<18x18xbf16>, vector<18x32xbf16>, vector<18x32xf32> -> vector<18x32xf32>
    %212 = vector.broadcast %3 : vector<1x32xf32> to vector<18x32xf32>
    %213 = arith.mulf %211, %212 : vector<18x32xf32>
    %214 = arith.addf %194, %213 : vector<18x32xf32>
    %215 = vector.broadcast %5 : vector<1x32xf32> to vector<18x32xf32>
    %216 = arith.mulf %189, %215 : vector<18x32xf32>
    %217 = arith.truncf %216 : vector<18x32xf32> to vector<18x32xbf16>
    %cst_95 = arith.constant dense<0.000000e+00> : vector<18x18xf32>
    %218 = tpu.matmul %217, %191, %cst_95 {dimension_numbers = #tpu.dot_dimension_numbers<[1], [1], [0], [0], [0, 0, 1, 0], [], []>} : vector<18x32xbf16>, vector<18x32xbf16>, vector<18x18xf32> -> vector<18x18xf32>
    %219 = arith.addf %218, %1 : vector<18x18xf32>
    %cst_96 = arith.constant dense<0xFF800000> : vector<18xf32>
    %220 = vector.multi_reduction <maximumf>, %219, %cst_96 [1] : vector<18x18xf32> to vector<18xf32>
    %221 = vector.shape_cast %220 : vector<18xf32> to vector<18x1xf32>
    %222 = vector.broadcast %221 : vector<18x1xf32> to vector<18x18xf32>
    %223 = arith.subf %219, %222 : vector<18x18xf32>
    %224 = math.exp %223 : vector<18x18xf32>
    %cst_97 = arith.constant dense<0.000000e+00> : vector<18xf32>
    %225 = vector.multi_reduction <add>, %224, %cst_97 [1] : vector<18x18xf32> to vector<18xf32>
    %226 = vector.shape_cast %225 : vector<18xf32> to vector<18x1xf32>
    %227 = tpu.reciprocal %226 {approx = true} : vector<18x1xf32> -> vector<18x1xf32>
    %228 = vector.broadcast %227 : vector<18x1xf32> to vector<18x18xf32>
    %229 = arith.mulf %224, %228 : vector<18x18xf32>
    %230 = arith.truncf %229 : vector<18x18xf32> to vector<18x18xbf16>
    %cst_98 = arith.constant dense<0.000000e+00> : vector<18x32xf32>
    %231 = tpu.matmul %230, %193, %cst_98 {dimension_numbers = #tpu.dot_dimension_numbers<[1], [0], [0], [1], [0, 0, 1, 1], [], []>} : vector<18x18xbf16>, vector<18x32xbf16>, vector<18x32xf32> -> vector<18x32xf32>
    %232 = vector.broadcast %5 : vector<1x32xf32> to vector<18x32xf32>
    %233 = arith.mulf %231, %232 : vector<18x32xf32>
    %234 = arith.addf %214, %233 : vector<18x32xf32>
    %235 = arith.truncf %234 : vector<18x32xf32> to vector<18x32xbf16>
    %c1_99 = arith.constant 1 : index
    %c0_100 = arith.constant 0 : index
    %c0_101 = arith.constant 0 : index
    %236 = vector.load %arg7[%c1_99, %c0_100, %c0_101] : memref<2x32x32xbf16, #tpu.memory_space<vmem>>, vector<1x32x32xbf16>
    %237 = vector.shape_cast %236 : vector<1x32x32xbf16> to vector<32x32xbf16>
    %cst_102 = arith.constant dense<0.000000e+00> : vector<18x32xf32>
    %238 = tpu.matmul %235, %237, %cst_102 {dimension_numbers = #tpu.dot_dimension_numbers<[1], [0], [0], [1], [0, 0, 1, 1], [], []>} : vector<18x32xbf16>, vector<32x32xbf16>, vector<18x32xf32> -> vector<18x32xf32>
    %239 = arith.addf %152, %238 : vector<18x32xf32>
    %c1_103 = arith.constant 1 : index
    %c0_104 = arith.constant 0 : index
    %c0_105 = arith.constant 0 : index
    %240 = vector.load %arg8[%c1_103, %c0_104, %c0_105] : memref<2x1x32xf32, #tpu.memory_space<vmem>>, vector<1x1x32xf32>
    %241 = vector.shape_cast %240 : vector<1x1x32xf32> to vector<1x32xf32>
    %242 = vector.broadcast %241 : vector<1x32xf32> to vector<18x32xf32>
    %243 = arith.addf %239, %242 : vector<18x32xf32>
    %c1_106 = arith.constant 1 : index
    %c0_107 = arith.constant 0 : index
    %c0_108 = arith.constant 0 : index
    %244 = vector.load %arg9[%c1_106, %c0_107, %c0_108] : memref<2x1x32xf32, #tpu.memory_space<vmem>>, vector<1x1x32xf32>
    %245 = vector.shape_cast %244 : vector<1x1x32xf32> to vector<1x32xf32>
    %c1_109 = arith.constant 1 : index
    %c0_110 = arith.constant 0 : index
    %c0_111 = arith.constant 0 : index
    %246 = vector.load %arg10[%c1_109, %c0_110, %c0_111] : memref<2x1x32xf32, #tpu.memory_space<vmem>>, vector<1x1x32xf32>
    %247 = vector.shape_cast %246 : vector<1x1x32xf32> to vector<1x32xf32>
    %cst_112 = arith.constant dense<0.000000e+00> : vector<18xf32>
    %248 = vector.multi_reduction <add>, %243, %cst_112 [1] : vector<18x32xf32> to vector<18xf32>
    %249 = vector.shape_cast %248 : vector<18xf32> to vector<18x1xf32>
    %cst_113 = arith.constant 3.200000e+01 : f32
    %250 = vector.broadcast %cst_113 : f32 to vector<18x1xf32>
    %251 = arith.divf %249, %250 : vector<18x1xf32>
    %252 = vector.broadcast %251 : vector<18x1xf32> to vector<18x32xf32>
    %253 = arith.subf %243, %252 : vector<18x32xf32>
    %254 = arith.mulf %253, %253 : vector<18x32xf32>
    %cst_114 = arith.constant dense<0.000000e+00> : vector<18xf32>
    %255 = vector.multi_reduction <add>, %254, %cst_114 [1] : vector<18x32xf32> to vector<18xf32>
    %256 = vector.shape_cast %255 : vector<18xf32> to vector<18x1xf32>
    %cst_115 = arith.constant 3.200000e+01 : f32
    %257 = vector.broadcast %cst_115 : f32 to vector<18x1xf32>
    %258 = arith.divf %256, %257 : vector<18x1xf32>
    %259 = vector.broadcast %251 : vector<18x1xf32> to vector<18x32xf32>
    %260 = arith.subf %243, %259 : vector<18x32xf32>
    %cst_116 = arith.constant 9.99999974E-6 : f32
    %261 = vector.broadcast %cst_116 : f32 to vector<18x1xf32>
    %262 = arith.addf %258, %261 : vector<18x1xf32>
    %263 = math.rsqrt %262 : vector<18x1xf32>
    %264 = vector.broadcast %263 : vector<18x1xf32> to vector<18x32xf32>
    %265 = arith.mulf %260, %264 : vector<18x32xf32>
    %266 = vector.broadcast %245 : vector<1x32xf32> to vector<18x32xf32>
    %267 = arith.mulf %265, %266 : vector<18x32xf32>
    %268 = vector.broadcast %247 : vector<1x32xf32> to vector<18x32xf32>
    %269 = arith.addf %267, %268 : vector<18x32xf32>
    %270 = arith.truncf %269 : vector<18x32xf32> to vector<18x32xbf16>
    %c1_117 = arith.constant 1 : index
    %c0_118 = arith.constant 0 : index
    %c0_119 = arith.constant 0 : index
    %271 = vector.load %arg11[%c1_117, %c0_118, %c0_119] : memref<2x32x128xbf16, #tpu.memory_space<vmem>>, vector<1x32x128xbf16>
    %272 = vector.shape_cast %271 : vector<1x32x128xbf16> to vector<32x128xbf16>
    %cst_120 = arith.constant dense<0.000000e+00> : vector<18x128xf32>
    %273 = tpu.matmul %270, %272, %cst_120 {dimension_numbers = #tpu.dot_dimension_numbers<[1], [0], [0], [1], [0, 0, 1, 1], [], []>} : vector<18x32xbf16>, vector<32x128xbf16>, vector<18x128xf32> -> vector<18x128xf32>
    %c1_121 = arith.constant 1 : index
    %c0_122 = arith.constant 0 : index
    %c0_123 = arith.constant 0 : index
    %274 = vector.load %arg12[%c1_121, %c0_122, %c0_123] : memref<2x1x128xf32, #tpu.memory_space<vmem>>, vector<1x1x128xf32>
    %275 = vector.shape_cast %274 : vector<1x1x128xf32> to vector<1x128xf32>
    %276 = vector.broadcast %275 : vector<1x128xf32> to vector<18x128xf32>
    %277 = arith.addf %273, %276 : vector<18x128xf32>
    %278 = arith.mulf %277, %277 : vector<18x128xf32>
    %279 = arith.mulf %277, %278 : vector<18x128xf32>
    %cst_124 = arith.constant 4.471500e-02 : f32
    %280 = vector.broadcast %cst_124 : f32 to vector<18x128xf32>
    %281 = arith.mulf %280, %279 : vector<18x128xf32>
    %282 = arith.addf %277, %281 : vector<18x128xf32>
    %cst_125 = arith.constant 0.797884583 : f32
    %283 = vector.broadcast %cst_125 : f32 to vector<18x128xf32>
    %284 = arith.mulf %283, %282 : vector<18x128xf32>
    %285 = math.tanh %284 : vector<18x128xf32>
    %cst_126 = arith.constant 1.000000e+00 : f32
    %286 = vector.broadcast %cst_126 : f32 to vector<18x128xf32>
    %287 = arith.addf %286, %285 : vector<18x128xf32>
    %cst_127 = arith.constant 5.000000e-01 : f32
    %288 = vector.broadcast %cst_127 : f32 to vector<18x128xf32>
    %289 = arith.mulf %288, %287 : vector<18x128xf32>
    %290 = arith.mulf %277, %289 : vector<18x128xf32>
    %291 = arith.truncf %290 : vector<18x128xf32> to vector<18x128xbf16>
    %c1_128 = arith.constant 1 : index
    %c0_129 = arith.constant 0 : index
    %c0_130 = arith.constant 0 : index
    %292 = vector.load %arg13[%c1_128, %c0_129, %c0_130] : memref<2x128x32xbf16, #tpu.memory_space<vmem>>, vector<1x128x32xbf16>
    %293 = vector.shape_cast %292 : vector<1x128x32xbf16> to vector<128x32xbf16>
    %cst_131 = arith.constant dense<0.000000e+00> : vector<18x32xf32>
    %294 = tpu.matmul %291, %293, %cst_131 {dimension_numbers = #tpu.dot_dimension_numbers<[1], [0], [0], [1], [0, 0, 1, 1], [], []>} : vector<18x128xbf16>, vector<128x32xbf16>, vector<18x32xf32> -> vector<18x32xf32>
    %c1_132 = arith.constant 1 : index
    %c0_133 = arith.constant 0 : index
    %c0_134 = arith.constant 0 : index
    %295 = vector.load %arg14[%c1_132, %c0_133, %c0_134] : memref<2x1x32xf32, #tpu.memory_space<vmem>>, vector<1x1x32xf32>
    %296 = vector.shape_cast %295 : vector<1x1x32xf32> to vector<1x32xf32>
    %297 = vector.broadcast %296 : vector<1x32xf32> to vector<18x32xf32>
    %298 = arith.addf %294, %297 : vector<18x32xf32>
    %299 = arith.addf %243, %298 : vector<18x32xf32>
    %c0_135 = arith.constant 0 : index
    %c0_136 = arith.constant 0 : index
    %300 = vector.load %arg15[%c0_135, %c0_136] : memref<1x32xf32, #tpu.memory_space<vmem>>, vector<1x32xf32>
    %c0_137 = arith.constant 0 : index
    %c0_138 = arith.constant 0 : index
    %301 = vector.load %arg16[%c0_137, %c0_138] : memref<1x32xf32, #tpu.memory_space<vmem>>, vector<1x32xf32>
    %cst_139 = arith.constant dense<0.000000e+00> : vector<18xf32>
    %302 = vector.multi_reduction <add>, %299, %cst_139 [1] : vector<18x32xf32> to vector<18xf32>
    %303 = vector.shape_cast %302 : vector<18xf32> to vector<18x1xf32>
    %cst_140 = arith.constant 3.200000e+01 : f32
    %304 = vector.broadcast %cst_140 : f32 to vector<18x1xf32>
    %305 = arith.divf %303, %304 : vector<18x1xf32>
    %306 = vector.broadcast %305 : vector<18x1xf32> to vector<18x32xf32>
    %307 = arith.subf %299, %306 : vector<18x32xf32>
    %308 = arith.mulf %307, %307 : vector<18x32xf32>
    %cst_141 = arith.constant dense<0.000000e+00> : vector<18xf32>
    %309 = vector.multi_reduction <add>, %308, %cst_141 [1] : vector<18x32xf32> to vector<18xf32>
    %310 = vector.shape_cast %309 : vector<18xf32> to vector<18x1xf32>
    %cst_142 = arith.constant 3.200000e+01 : f32
    %311 = vector.broadcast %cst_142 : f32 to vector<18x1xf32>
    %312 = arith.divf %310, %311 : vector<18x1xf32>
    %313 = vector.broadcast %305 : vector<18x1xf32> to vector<18x32xf32>
    %314 = arith.subf %299, %313 : vector<18x32xf32>
    %cst_143 = arith.constant 9.99999974E-6 : f32
    %315 = vector.broadcast %cst_143 : f32 to vector<18x1xf32>
    %316 = arith.addf %312, %315 : vector<18x1xf32>
    %317 = math.rsqrt %316 : vector<18x1xf32>
    %318 = vector.broadcast %317 : vector<18x1xf32> to vector<18x32xf32>
    %319 = arith.mulf %314, %318 : vector<18x32xf32>
    %320 = vector.broadcast %300 : vector<1x32xf32> to vector<18x32xf32>
    %321 = arith.mulf %319, %320 : vector<18x32xf32>
    %322 = vector.broadcast %301 : vector<1x32xf32> to vector<18x32xf32>
    %323 = arith.addf %321, %322 : vector<18x32xf32>
    %324 = arith.truncf %323 : vector<18x32xf32> to vector<18x32xbf16>
    %c0_144 = arith.constant 0 : index
    %c0_145 = arith.constant 0 : index
    %325 = vector.load %arg17[%c0_144, %c0_145] : memref<32x128xbf16, #tpu.memory_space<vmem>>, vector<32x128xbf16>
    %cst_146 = arith.constant dense<0.000000e+00> : vector<18x128xf32>
    %326 = tpu.matmul %324, %325, %cst_146 {dimension_numbers = #tpu.dot_dimension_numbers<[1], [0], [0], [1], [0, 0, 1, 1], [], []>} : vector<18x32xbf16>, vector<32x128xbf16>, vector<18x128xf32> -> vector<18x128xf32>
    %cst_147 = arith.constant 1.000000e+00 : f32
    %327 = vector.broadcast %cst_147 : f32 to vector<18x128xf32>
    %328 = arith.mulf %326, %327 : vector<18x128xf32>
    %cst_148 = arith.constant dense<0xFF800000> : vector<18xf32>
    %329 = vector.multi_reduction <maximumf>, %328, %cst_148 [1] : vector<18x128xf32> to vector<18xf32>
    %330 = vector.shape_cast %329 : vector<18xf32> to vector<18x1xf32>
    %331 = vector.broadcast %330 : vector<18x1xf32> to vector<18x128xf32>
    %332 = arith.subf %328, %331 : vector<18x128xf32>
    %333 = math.exp %332 : vector<18x128xf32>
    %c0_149 = arith.constant 0 : index
    %c0_150 = arith.constant 0 : index
    %334 = vector.load %arg18[%c0_149, %c0_150] : memref<1x128xf32, #tpu.memory_space<vmem>>, vector<1x128xf32>
    %335 = vector.broadcast %334 : vector<1x128xf32> to vector<18x128xf32>
    %336 = arith.mulf %333, %335 : vector<18x128xf32>
    %cst_151 = arith.constant dense<0.000000e+00> : vector<18xf32>
    %337 = vector.multi_reduction <add>, %336, %cst_151 [1] : vector<18x128xf32> to vector<18xf32>
    %338 = vector.shape_cast %337 : vector<18xf32> to vector<18x1xf32>
    %339 = vector.broadcast %338 : vector<18x1xf32> to vector<18x128xf32>
    %340 = arith.divf %336, %339 : vector<18x128xf32>
    %c0_152 = arith.constant 0 : index
    %c0_153 = arith.constant 0 : index
    %341 = vector.load %arg19[%c0_152, %c0_153] : memref<18x128xf32, #tpu.memory_space<vmem>>, vector<18x128xf32>
    tpu.vector_store %arg19[%c0_152, %c0_153], %340 {strides = array<i32>} : memref<18x128xf32, #tpu.memory_space<vmem>>, vector<18x128xf32>,
    return
  }
}

</mosaic_0001>

<llo_original>
// kernel: tpu_custom_call.1
$region0: #{tpu_custom_call.1}
  #allocation0 [shape = 'u32[]', space=smem, size = 0x4, offset = 0x4, fixed_abs, tag = 'smem constant byte address 0x4 - core index']
  #allocation1 [shape = 'u32[144,128]{1,0:T(1,128)}', space=vmem, size = 0x12000, scoped, tag = 'internal scratch']
  %s0 = inlined_call_operand.vmem [shape: f32[18,32], index: 0, kind: input, shape index: {}]
  %s1 = inlined_call_operand.vmem [shape: f32[18,18], index: 1, kind: input, shape index: {}]
  %s2 = inlined_call_operand.vmem [shape: f32[2,1,32], index: 2, kind: input, shape index: {}]
  %s3 = inlined_call_operand.vmem [shape: f32[2,1,32], index: 3, kind: input, shape index: {}]
  %s4 = inlined_call_operand.vmem [shape: f32[2,1,32], index: 4, kind: input, shape index: {}]
  %s5 = inlined_call_operand.vmem [shape: bf16[2,32,96], index: 5, kind: input, shape index: {}]
  %s6 = inlined_call_operand.vmem [shape: f32[2,1,96], index: 6, kind: input, shape index: {}]
  %s7 = inlined_call_operand.vmem [shape: bf16[2,32,32], index: 7, kind: input, shape index: {}]
  %s8 = inlined_call_operand.vmem [shape: f32[2,1,32], index: 8, kind: input, shape index: {}]
  %s9 = inlined_call_operand.vmem [shape: f32[2,1,32], index: 9, kind: input, shape index: {}]
  %s10 = inlined_call_operand.vmem [shape: f32[2,1,32], index: 10, kind: input, shape index: {}]
  %s11 = inlined_call_operand.vmem [shape: bf16[2,32,128], index: 11, kind: input, shape index: {}]
  %s12 = inlined_call_operand.vmem [shape: f32[2,1,128], index: 12, kind: input, shape index: {}]
  %s13 = inlined_call_operand.vmem [shape: bf16[2,128,32], index: 13, kind: input, shape index: {}]
  %s14 = inlined_call_operand.vmem [shape: f32[2,1,32], index: 14, kind: input, shape index: {}]
  %s15 = inlined_call_operand.vmem [shape: f32[1,32], index: 15, kind: input, shape index: {}]
  %s16 = inlined_call_operand.vmem [shape: f32[1,32], index: 16, kind: input, shape index: {}]
  %s17 = inlined_call_operand.vmem [shape: bf16[32,128], index: 17, kind: input, shape index: {}]
  %s18 = inlined_call_operand.vmem [shape: f32[1,128], index: 18, kind: input, shape index: {}]
  %s19 = inlined_call_operand.hbm [shape: f32[18,128], index: 19, kind: output, shape index: {}]
  %s20 = sld [smem:[#allocation0]]
  $region86: #{tpu_custom_call.1} parent=0
    _
  %s22 = ssub.s32 1, %s20
  %s23 = scalar_select 0, %s22, %s20
  $region1: #{tpu_custom_call.1} parent=0
    #allocation2 [shape = 'u8[12288]{0}', space=vmem, size = 0x3000, scoped, tag = 'output window, operand 0, single buffered']
    #allocation3 [shape = 's32[1]{0}', space=sflag, size = 0x4, scoped, tag = 'scoped memory for tpu_custom_call.1']
    %24 = vsyncpa [#allocation3], 0
    // Predicated region
    $region2: #{tpu_custom_call.1} parent=1 // pred_check
      _
    $region3: #{tpu_custom_call.1} parent=1 // pred_check_branch
      %26 = sbr.rel (0) target = $region5
    $region4: #{tpu_custom_call.1} parent=1 // pred_region
      _
    $region5: #{tpu_custom_call.1} parent=1 // pred_fallthru
      _
    // Predicated region
    $region6: #{tpu_custom_call.1} parent=1 // pred_check
      _
    $region7: #{tpu_custom_call.1} parent=1 // pred_check_branch
      %28 = sbr.rel (0) target = $region9
    $region8: #{tpu_custom_call.1} parent=1 // pred_region
      _
    $region9: #{tpu_custom_call.1} parent=1 // pred_fallthru
      _
    // Predicated region
    $region10: #{tpu_custom_call.1} parent=1 // pred_check
      _
    $region11: #{tpu_custom_call.1} parent=1 // pred_check_branch
      %30 = sbr.rel (0) target = $region13
    $region12: #{tpu_custom_call.1} parent=1 // pred_region
      _
    $region13: #{tpu_custom_call.1} parent=1 // pred_fallthru
      _
    // Predicated region
    $region14: #{tpu_custom_call.1} parent=1 // pred_check
      _
    $region15: #{tpu_custom_call.1} parent=1 // pred_check_branch
      %32 = sbr.rel (0) target = $region17
    $region16: #{tpu_custom_call.1} parent=1 // pred_region
      _
    $region17: #{tpu_custom_call.1} parent=1 // pred_fallthru
      _
    // Predicated region
    $region18: #{tpu_custom_call.1} parent=1 // pred_check
      _
    $region19: #{tpu_custom_call.1} parent=1 // pred_check_branch
      %34 = sbr.rel (0) target = $region21
    $region20: #{tpu_custom_call.1} parent=1 // pred_region
      _
    $region21: #{tpu_custom_call.1} parent=1 // pred_fallthru
      _
    // Predicated region
    $region22: #{tpu_custom_call.1} parent=1 // pred_check
      _
    $region23: #{tpu_custom_call.1} parent=1 // pred_check_branch
      %36 = sbr.rel (0) target = $region25
    $region24: #{tpu_custom_call.1} parent=1 // pred_region
      _
    $region25: #{tpu_custom_call.1} parent=1 // pred_fallthru
      _
    // Predicated region
    $region26: #{tpu_custom_call.1} parent=1 // pred_check
      _
    $region27: #{tpu_custom_call.1} parent=1 // pred_check_branch
      %38 = sbr.rel (0) target = $region29
    $region28: #{tpu_custom_call.1} parent=1 // pred_region
      _
    $region29: #{tpu_custom_call.1} parent=1 // pred_fallthru
      _
    // Predicated region
    $region30: #{tpu_custom_call.1} parent=1 // pred_check
      _
    $region31: #{tpu_custom_call.1} parent=1 // pred_check_branch
      %40 = sbr.rel (0) target = $region33
    $region32: #{tpu_custom_call.1} parent=1 // pred_region
      _
    $region33: #{tpu_custom_call.1} parent=1 // pred_fallthru
      _
    // Predicated region
    $region34: #{tpu_custom_call.1} parent=1 // pred_check
      _
    $region35: #{tpu_custom_call.1} parent=1 // pred_check_branch
      %42 = sbr.rel (0) target = $region37
    $region36: #{tpu_custom_call.1} parent=1 // pred_region
      _
    $region37: #{tpu_custom_call.1} parent=1 // pred_fallthru
      _
    // Predicated region
    $region38: #{tpu_custom_call.1} parent=1 // pred_check
      _
    $region39: #{tpu_custom_call.1} parent=1 // pred_check_branch
      %44 = sbr.rel (0) target = $region41
    $region40: #{tpu_custom_call.1} parent=1 // pred_region
      _
    $region41: #{tpu_custom_call.1} parent=1 // pred_fallthru
      _
    // Predicated region
    $region42: #{tpu_custom_call.1} parent=1 // pred_check
      _
    $region43: #{tpu_custom_call.1} parent=1 // pred_check_branch
      %46 = sbr.rel (0) target = $region45
    $region44: #{tpu_custom_call.1} parent=1 // pred_region
      _
    $region45: #{tpu_custom_call.1} parent=1 // pred_fallthru
      _
    // Predicated region
    $region46: #{tpu_custom_call.1} parent=1 // pred_check
      _
    $region47: #{tpu_custom_call.1} parent=1 // pred_check_branch
      %48 = sbr.rel (0) target = $region49
    $region48: #{tpu_custom_call.1} parent=1 // pred_region
      _
    $region49: #{tpu_custom_call.1} parent=1 // pred_fallthru
      _
    // Predicated region
    $region50: #{tpu_custom_call.1} parent=1 // pred_check
      _
    $region51: #{tpu_custom_call.1} parent=1 // pred_check_branch
      %50 = sbr.rel (0) target = $region53
    $region52: #{tpu_custom_call.1} parent=1 // pred_region
      _
    $region53: #{tpu_custom_call.1} parent=1 // pred_fallthru
      _
    // Predicated region
    $region54: #{tpu_custom_call.1} parent=1 // pred_check
      _
    $region55: #{tpu_custom_call.1} parent=1 // pred_check_branch
      %52 = sbr.rel (0) target = $region57
    $region56: #{tpu_custom_call.1} parent=1 // pred_region
      _
    $region57: #{tpu_custom_call.1} parent=1 // pred_fallthru
      _
    // Predicated region
    $region58: #{tpu_custom_call.1} parent=1 // pred_check
      _
    $region59: #{tpu_custom_call.1} parent=1 // pred_check_branch
      %54 = sbr.rel (0) target = $region61
    $region60: #{tpu_custom_call.1} parent=1 // pred_region
      _
    $region61: #{tpu_custom_call.1} parent=1 // pred_fallthru
      _
    // Predicated region
    $region62: #{tpu_custom_call.1} parent=1 // pred_check
      _
    $region63: #{tpu_custom_call.1} parent=1 // pred_check_branch
      %56 = sbr.rel (0) target = $region65
    $region64: #{tpu_custom_call.1} parent=1 // pred_region
      _
    $region65: #{tpu_custom_call.1} parent=1 // pred_fallthru
      _
    // Predicated region
    $region66: #{tpu_custom_call.1} parent=1 // pred_check
      _
    $region67: #{tpu_custom_call.1} parent=1 // pred_check_branch
      %58 = sbr.rel (0) target = $region69
    $region68: #{tpu_custom_call.1} parent=1 // pred_region
      _
    $region69: #{tpu_custom_call.1} parent=1 // pred_fallthru
      _
    // Predicated region
    $region70: #{tpu_custom_call.1} parent=1 // pred_check
      _
    $region71: #{tpu_custom_call.1} parent=1 // pred_check_branch
      %60 = sbr.rel (0) target = $region73
    $region72: #{tpu_custom_call.1} parent=1 // pred_region
      _
    $region73: #{tpu_custom_call.1} parent=1 // pred_fallthru
      _
    // Predicated region
    $region74: #{tpu_custom_call.1} parent=1 // pred_check
      _
    $region75: #{tpu_custom_call.1} parent=1 // pred_check_branch
      %62 = sbr.rel (0) target = $region77
    $region76: #{tpu_custom_call.1} parent=1 // pred_region
      _
    $region77: #{tpu_custom_call.1} parent=1 // pred_fallthru
      _
    %v64 = vld [vmem:[%s0] sm:$0xff]
    %v65 = vld [vmem:[%s0 + $0x8] sm:$0xff]
    %v66 = vld [vmem:[%s0 + $0x10] sm:$0x3]
    %v67 = vld [vmem:[%s1] sm:$0xff]
    %v68 = vld [vmem:[%s1 + $0x8] sm:$0xff]
    %v69 = vld [vmem:[%s1 + $0x10] sm:$0x3]
    %v70 = vld [vmem:[%s2] sm:$0x1]
    %s71 = scalar_lea.vmem %s2, 1
    %v72 = vld [vmem:[%s71] sm:$0x1]
    %v73 = vld [vmem:[%s3] sm:$0x1]
    %v74 = vld [vmem:[%s4] sm:$0x1]
    %vm75 = vcmask 261120
    %v76 = vsel %vm75, %v64, 0.0
    %77 = vadd.xlane.f32.xlu0 %v76
    %v78 = vpop.xlane.xlu0 %77
    %v79 = vsel %vm75, %v65, 0.0
    %80 = vadd.xlane.f32.xlu0 %v79
    %v81 = vpop.xlane.xlu0 %80
    %vm82 = vcmask 254976
    %v83 = vsel %vm82, %v66, 0.0
    %84 = vadd.xlane.f32.xlu0 %v83
    %v85 = vpop.xlane.xlu0 %84
    %v86 = vrcp.pop 32.0
    %v87 = vmul.f32 %v78, %v86
    %v88 = vmul.f32 %v81, %v86
    %v89 = vmul.f32 %v85, %v86
    %v90 = vsub.f32 %v64, %v87
    %v91 = vsub.f32 %v65, %v88
    %v92 = vsub.f32 %v66, %v89
    %v93 = vmul.f32 %v90, %v90
    %v94 = vmul.f32 %v91, %v91
    %v95 = vmul.f32 %v92, %v92
    %v96 = vsel %vm75, %v93, 0.0
    %97 = vadd.xlane.f32.xlu0 %v96
    %v98 = vpop.xlane.xlu0 %97
    %v99 = vsel %vm75, %v94, 0.0
    %100 = vadd.xlane.f32.xlu0 %v99
    %v101 = vpop.xlane.xlu0 %100
    %v102 = vsel %vm82, %v95, 0.0
    %103 = vadd.xlane.f32.xlu0 %v102
    %v104 = vpop.xlane.xlu0 %103
    %v105 = vmul.f32 %v98, %v86
    %v106 = vmul.f32 %v101, %v86
    %v107 = vmul.f32 %v104, %v86
    %v108 = vadd.f32 %v105, 1e-05
    %v109 = vadd.f32 %v106, 1e-05
    %v110 = vadd.f32 %v107, 1e-05
    %v111 = vrsqrt.pop %v108
    %v112 = vrsqrt.pop %v109
    %v113 = vrsqrt.pop %v110
    %v114 = vmul.f32 %v90, %v111
    %v115 = vmul.f32 %v91, %v112
    %v116 = vmul.f32 %v92, %v113
    %v118 = vlaneseq
    %v119 = vshrl.u32 %v118, 7
    %v120 = vsub.s32 0, %v119
    %v121 = vrot.slane %v73, %v120
    %v123 = vmul.f32 %v114, %v121
    %v124 = vmul.f32 %v115, %v121
    %v125 = vmul.f32 %v116, %v121
    %v127 = vlaneseq
    %v128 = vshrl.u32 %v127, 7
    %v129 = vsub.s32 0, %v128
    %v130 = vrot.slane %v74, %v129
    %v132 = vadd.f32 %v123, %v130
    %v133 = vadd.f32 %v124, %v130
    %v134 = vadd.f32 %v125, %v130
    %v135 = vpack.c.bf16 %v133, %v132
    %v136 = vpack.c.bf16 %v134, %v134
    %v137 = vld [vmem:[%s5] sm:$0xf]
    %v138 = vld [vmem:[%s5 + $0x4] sm:$0xf]
    %v139 = vld [vmem:[%s5 + $0x8] sm:$0xf]
    %v140 = vld [vmem:[%s5 + $0xc] sm:$0xf]
    %v141 = vld [vmem:[%s6] sm:$0x1]
    %v143 = vlaneseq
    %v144 = vshrl.u32 %v143, 7
    %v145 = vsub.s32 0, %v144
    %v146 = vrot.slane %v141, %v145
    %v152 = vunpack.c.l.b16 %v137
    %v153 = vunpack.c.l.b16 %v138
    %v154 = vunpack.c.l.b16 %v139
    %v155 = vunpack.c.l.b16 %v140
    %v156 = vpack.c.b16 %v153, %v152
    %v157 = vpack.c.b16 %v155, %v154
    %v161 = vsel %vm75, %v135, 0
    %v164 = vsel %vm75, %v136, 0
    %166 = vmatprep.subr.bf16.mxu0 0
    %167 = vmatpush1.bf16.msra.mxu0 0
    %168 = vmatprep.subr.bf16.mxu0 0
    %169 = vmatpush1.bf16.msra.mxu0 0
    %170 = vmatprep.subr.bf16.mxu0 0
    %171 = vmatpush1.bf16.msra.mxu0 0
    %172 = vmatprep.subr.bf16.mxu0 0
    %173 = vmatpush1.bf16.msra.mxu0 0
    %174 = vmatprep.subr.bf16.mxu0 0
    %175 = vmatpush1.bf16.msra.mxu0 0
    %176 = vmatprep.subr.bf16.mxu0 0
    %177 = vmatpush1.bf16.msra.mxu0 0
    %178 = vmatprep.subr.bf16.mxu0 0
    %179 = vmatpush1.bf16.msra.mxu0 %v157
    %180 = vmatprep.subr.bf16.mxu0 0
    %181 = vmatpush1.bf16.msra.mxu0 %v156
    %182 = vmatprep.subr.bf16.mxu0 0
    %183 = vmatpush2.bf16.msra.mxu0 0
    %184 = vmatprep.subr.bf16.mxu0 0
    %185 = vmatpush2.bf16.msra.mxu0 0
    %186 = vmatprep.subr.bf16.mxu0 0
    %187 = vmatpush2.bf16.msra.mxu0 0
    %188 = vmatprep.subr.bf16.mxu0 0
    %189 = vmatpush2.bf16.msra.mxu0 0
    %190 = vmatprep.subr.bf16.mxu0 0
    %191 = vmatpush2.bf16.msra.mxu0 0
    %192 = vmatprep.subr.bf16.mxu0 0
    %193 = vmatpush2.bf16.msra.mxu0 0
    %194 = vmatprep.subr.bf16.mxu0 0
    %195 = vmatpush2.bf16.msra.mxu0 0
    %196 = vmatprep.subr.bf16.mxu0 0
    %197 = vmatpush2.bf16.msra.mxu0 0
    %198 = vmatprep.mubr.bf16.mxu0 0
    %199 = vmatmul.mubr.bf16.gmra.mxu0 %v161
    %v200 = vpop.f32.mrf.mxu0
    %v201 = vadd.f32 %v146, %v200
    %v202 = vpop.f32.mrf.mxu0
    %v203 = vpop.f32.mrf.mxu0
    %v204 = vadd.f32 %v146, %v203
    %v205 = vpop.f32.mrf.mxu0
    %206 = vmatprep.mubr.bf16.mxu0 0
    %207 = vmatmul.mubr.bf16.gmra.mxu0 %v164
    %v208 = vpop.f32.mrf.mxu0
    %v209 = vadd.f32 %v146, %v208
    %v210 = vpop.f32.mrf.mxu0
    %v211 = vpop.f32.mrf.mxu0
    %v212 = vpop.f32.mrf.mxu0
    %213 = vdwg.mxu0
    %v214 = vmul.f32 %v201, 0.25
    %v215 = vmul.f32 %v204, 0.25
    %v216 = vmul.f32 %v209, 0.25
    %v217 = vpack.c.bf16 %v204, %v201
    %v218 = vpack.c.bf16 %v209, %v209
    %v220 = vlaneseq
    %v221 = vshrl.u32 %v220, 7
    %v222 = vsub.s32 0, %v221
    %v223 = vrot.slane %v70, %v222
    %v225 = vmul.f32 %v214, %v223
    %v226 = vmul.f32 %v215, %v223
    %v227 = vmul.f32 %v216, %v223
    %v228 = vpack.c.bf16 %v226, %v225
    %v229 = vpack.c.bf16 %v227, %v227
    %232 = vrot.lane.b32.xlu0 %v217, 96
    %v233 = vpop.permute.xlu0 %232
    %234 = vrot.lane.b32.xlu0 %v218, 96
    %v235 = vpop.permute.xlu0 %234
    %v237 = vsel %vm75, %v228, 0
    %v240 = vsel %vm75, %v229, 0
    %v243 = vsel %vm75, %v233, 0
    %v246 = vsel %vm75, %v235, 0
    %248 = vmatprep.subr.bf16.mxu0 0
    %249 = vmatpush1.bf16.xpose.msra.mxu0 0
    %250 = vmatprep.subr.bf16.mxu0 0
    %251 = vmatpush1.bf16.xpose.msra.mxu0 0
    %252 = vmatprep.subr.bf16.mxu0 0
    %253 = vmatpush1.bf16.xpose.msra.mxu0 0
    %254 = vmatprep.subr.bf16.mxu0 0
    %255 = vmatpush1.bf16.xpose.msra.mxu0 0
    %256 = vmatprep.subr.bf16.mxu0 0
    %257 = vmatpush1.bf16.xpose.msra.mxu0 0
    %258 = vmatprep.subr.bf16.mxu0 0
    %259 = vmatpush1.bf16.xpose.msra.mxu0 0
    %260 = vmatprep.subr.bf16.mxu0 0
    %261 = vmatpush1.bf16.xpose.msra.mxu0 %v246
    %262 = vmatprep.subr.bf16.mxu0 0
    %263 = vmatpush1.bf16.xpose.msra.mxu0 %v243
    %264 = vmatprep.subr.bf16.mxu0 0
    %265 = vmatpush2.bf16.xpose.msra.mxu0 0
    %266 = vmatprep.subr.bf16.mxu0 0
    %267 = vmatpush2.bf16.xpose.msra.mxu0 0
    %268 = vmatprep.subr.bf16.mxu0 0
    %269 = vmatpush2.bf16.xpose.msra.mxu0 0
    %270 = vmatprep.subr.bf16.mxu0 0
    %271 = vmatpush2.bf16.xpose.msra.mxu0 0
    %272 = vmatprep.subr.bf16.mxu0 0
    %273 = vmatpush2.bf16.xpose.msra.mxu0 0
    %274 = vmatprep.subr.bf16.mxu0 0
    %275 = vmatpush2.bf16.xpose.msra.mxu0 0
    %276 = vmatprep.subr.bf16.mxu0 0
    %277 = vmatpush2.bf16.xpose.msra.mxu0 0
    %278 = vmatprep.subr.bf16.mxu0 0
    %279 = vmatpush2.bf16.xpose.msra.mxu0 0
    %280 = vmatprep.mubr.bf16.mxu0 0
    %281 = vmatmul.mubr.bf16.gmra.mxu0 %v237
    %v282 = vpop.f32.mrf.mxu0
    %v283 = vadd.f32 %v67, %v282
    %v284 = vpop.f32.mrf.mxu0
    %v285 = vpop.f32.mrf.mxu0
    %v286 = vadd.f32 %v68, %v285
    %v287 = vpop.f32.mrf.mxu0
    %288 = vmatprep.mubr.bf16.mxu0 0
    %289 = vmatmul.mubr.bf16.gmra.mxu0 %v240
    %v290 = vpop.f32.mrf.mxu0
    %v291 = vadd.f32 %v69, %v290
    %v292 = vpop.f32.mrf.mxu0
    %v293 = vpop.f32.mrf.mxu0
    %v294 = vpop.f32.mrf.mxu0
    %295 = vdwg.mxu0
    %vm296 = vcmask 146432
    %v297 = vsel %vm296, %v283, -inf
    %298 = vmax.xlane.f32.xlu0 %v297
    %v299 = vpop.xlane.xlu0 %298
    %v300 = vsel %vm296, %v286, -inf
    %301 = vmax.xlane.f32.xlu0 %v300
    %v302 = vpop.xlane.xlu0 %301
    %vm303 = vcmask 140288
    %v304 = vsel %vm303, %v291, -inf
    %305 = vmax.xlane.f32.xlu0 %v304
    %v306 = vpop.xlane.xlu0 %305
    %v307 = vsub.f32 %v283, %v299
    %v308 = vsub.f32 %v286, %v302
    %v309 = vsub.f32 %v291, %v306
    %v310 = vmul.f32 %v307, 1.442695
    %v311 = vpow.pop %v310
    %v312 = vmul.f32 %v308, 1.442695
    %v313 = vpow.pop %v312
    %v314 = vmul.f32 %v309, 1.442695
    %v315 = vpow.pop %v314
    %v316 = vsel %vm296, %v311, 0.0
    %317 = vadd.xlane.f32.xlu0 %v316
    %v318 = vpop.xlane.xlu0 %317
    %v319 = vsel %vm296, %v313, 0.0
    %320 = vadd.xlane.f32.xlu0 %v319
    %v321 = vpop.xlane.xlu0 %320
    %v322 = vsel %vm303, %v315, 0.0
    %323 = vadd.xlane.f32.xlu0 %v322
    %v324 = vpop.xlane.xlu0 %323
    %v325 = vrcp.pop %v318
    %v326 = vrcp.pop %v321
    %v327 = vrcp.pop %v324
    %v328 = vmul.f32 %v311, %v325
    %v329 = vmul.f32 %v313, %v326
    %v330 = vmul.f32 %v315, %v327
    %v331 = vpack.c.bf16 %v329, %v328
    %v332 = vpack.c.bf16 %v330, %v330
    %333 = vrot.lane.b32.xlu0 %v217, 64
    %v334 = vpop.permute.xlu0 %333
    %335 = vrot.lane.b32.xlu0 %v218, 64
    %v336 = vpop.permute.xlu0 %335
    %v339 = vsel %vm296, %v331, 0
    %v342 = vsel %vm296, %v332, 0
    %vm344 = vcmask 1040384
    %v346 = vsel %vm344, %v336, 0
    %348 = vmatprep.subr.bf16.mxu0 0
    %349 = vmatpush1.bf16.msra.mxu0 0
    %350 = vmatprep.subr.bf16.mxu0 0
    %351 = vmatpush1.bf16.msra.mxu0 0
    %352 = vmatprep.subr.bf16.mxu0 0
    %353 = vmatpush1.bf16.msra.mxu0 0
    %354 = vmatprep.subr.bf16.mxu0 0
    %355 = vmatpush1.bf16.msra.mxu0 0
    %356 = vmatprep.subr.bf16.mxu0 0
    %357 = vmatpush1.bf16.msra.mxu0 0
    %358 = vmatprep.subr.bf16.mxu0 0
    %359 = vmatpush1.bf16.msra.mxu0 0
    %360 = vmatprep.subr.bf16.mxu0 0
    %361 = vmatpush1.bf16.msra.mxu0 %v346
    %362 = vmatprep.subr.bf16.mxu0 0
    %363 = vmatpush1.bf16.msra.mxu0 %v334
    %364 = vmatprep.subr.bf16.mxu0 0
    %365 = vmatpush2.bf16.msra.mxu0 0
    %366 = vmatprep.subr.bf16.mxu0 0
    %367 = vmatpush2.bf16.msra.mxu0 0
    %368 = vmatprep.subr.bf16.mxu0 0
    %369 = vmatpush2.bf16.msra.mxu0 0
    %370 = vmatprep.subr.bf16.mxu0 0
    %371 = vmatpush2.bf16.msra.mxu0 0
    %372 = vmatprep.subr.bf16.mxu0 0
    %373 = vmatpush2.bf16.msra.mxu0 0
    %374 = vmatprep.subr.bf16.mxu0 0
    %375 = vmatpush2.bf16.msra.mxu0 0
    %376 = vmatprep.subr.bf16.mxu0 0
    %377 = vmatpush2.bf16.msra.mxu0 0
    %378 = vmatprep.subr.bf16.mxu0 0
    %379 = vmatpush2.bf16.msra.mxu0 0
    %380 = vmatprep.mubr.bf16.mxu0 0
    %381 = vmatmul.mubr.bf16.gmra.mxu0 %v339
    %v382 = vpop.f32.mrf.mxu0
    %v383 = vadd.f32 0.0, %v382
    %v384 = vpop.f32.mrf.mxu0
    %v385 = vpop.f32.mrf.mxu0
    %v386 = vadd.f32 0.0, %v385
    %v387 = vpop.f32.mrf.mxu0
    %388 = vmatprep.mubr.bf16.mxu0 0
    %389 = vmatmul.mubr.bf16.gmra.mxu0 %v342
    %v390 = vpop.f32.mrf.mxu0
    %v391 = vadd.f32 0.0, %v390
    %v392 = vpop.f32.mrf.mxu0
    %v393 = vpop.f32.mrf.mxu0
    %v394 = vpop.f32.mrf.mxu0
    %395 = vdwg.mxu0
    %v396 = vmul.f32 %v383, %v223
    %v397 = vmul.f32 %v386, %v223
    %v398 = vmul.f32 %v391, %v223
    %v399 = vadd.f32 %v396, 0.0
    %v400 = vadd.f32 %v397, 0.0
    %v401 = vadd.f32 %v398, 0.0
    %v403 = vlaneseq
    %v404 = vshrl.u32 %v403, 7
    %v405 = vsub.s32 0, %v404
    %v406 = vrot.slane %v72, %v405
    %v408 = vmul.f32 %v214, %v406
    %v409 = vmul.f32 %v215, %v406
    %v410 = vmul.f32 %v216, %v406
    %v411 = vpack.c.bf16 %v409, %v408
    %v412 = vpack.c.bf16 %v410, %v410
    %v414 = vsel %vm75, %v411, 0
    %v417 = vsel %vm75, %v412, 0
    %419 = vmatprep.subr.bf16.mxu0 0
    %420 = vmatpush1.bf16.xpose.msra.mxu0 0
    %421 = vmatprep.subr.bf16.mxu0 0
    %422 = vmatpush1.bf16.xpose.msra.mxu0 0
    %423 = vmatprep.subr.bf16.mxu0 0
    %424 = vmatpush1.bf16.xpose.msra.mxu0 0
    %425 = vmatprep.subr.bf16.mxu0 0
    %426 = vmatpush1.bf16.xpose.msra.mxu0 0
    %427 = vmatprep.subr.bf16.mxu0 0
    %428 = vmatpush1.bf16.xpose.msra.mxu0 0
    %429 = vmatprep.subr.bf16.mxu0 0
    %430 = vmatpush1.bf16.xpose.msra.mxu0 0
    %431 = vmatprep.subr.bf16.mxu0 0
    %432 = vmatpush1.bf16.xpose.msra.mxu0 %v246
    %433 = vmatprep.subr.bf16.mxu0 0
    %434 = vmatpush1.bf16.xpose.msra.mxu0 %v243
    %435 = vmatprep.subr.bf16.mxu0 0
    %436 = vmatpush2.bf16.xpose.msra.mxu0 0
    %437 = vmatprep.subr.bf16.mxu0 0
    %438 = vmatpush2.bf16.xpose.msra.mxu0 0
    %439 = vmatprep.subr.bf16.mxu0 0
    %440 = vmatpush2.bf16.xpose.msra.mxu0 0
    %441 = vmatprep.subr.bf16.mxu0 0
    %442 = vmatpush2.bf16.xpose.msra.mxu0 0
    %443 = vmatprep.subr.bf16.mxu0 0
    %444 = vmatpush2.bf16.xpose.msra.mxu0 0
    %445 = vmatprep.subr.bf16.mxu0 0
    %446 = vmatpush2.bf16.xpose.msra.mxu0 0
    %447 = vmatprep.subr.bf16.mxu0 0
    %448 = vmatpush2.bf16.xpose.msra.mxu0 0
    %449 = vmatprep.subr.bf16.mxu0 0
    %450 = vmatpush2.bf16.xpose.msra.mxu0 0
    %451 = vmatprep.mubr.bf16.mxu0 0
    %452 = vmatmul.mubr.bf16.gmra.mxu0 %v414
    %v453 = vpop.f32.mrf.mxu0
    %v454 = vadd.f32 %v67, %v453
    %v455 = vpop.f32.mrf.mxu0
    %v456 = vpop.f32.mrf.mxu0
    %v457 = vadd.f32 %v68, %v456
    %v458 = vpop.f32.mrf.mxu0
    %459 = vmatprep.mubr.bf16.mxu0 0
    %460 = vmatmul.mubr.bf16.gmra.mxu0 %v417
    %v461 = vpop.f32.mrf.mxu0
    %v462 = vadd.f32 %v69, %v461
    %v463 = vpop.f32.mrf.mxu0
    %v464 = vpop.f32.mrf.mxu0
    %v465 = vpop.f32.mrf.mxu0
    %466 = vdwg.mxu0
    %v467 = vsel %vm296, %v454, -inf
    %468 = vmax.xlane.f32.xlu0 %v467
    %v469 = vpop.xlane.xlu0 %468
    %v470 = vsel %vm296, %v457, -inf
    %471 = vmax.xlane.f32.xlu0 %v470
    %v472 = vpop.xlane.xlu0 %471
    %v473 = vsel %vm303, %v462, -inf
    %474 = vmax.xlane.f32.xlu0 %v473
    %v475 = vpop.xlane.xlu0 %474
    %v476 = vsub.f32 %v454, %v469
    %v477 = vsub.f32 %v457, %v472
    %v478 = vsub.f32 %v462, %v475
    %v479 = vmul.f32 %v476, 1.442695
    %v480 = vpow.pop %v479
    %v481 = vmul.f32 %v477, 1.442695
    %v482 = vpow.pop %v481
    %v483 = vmul.f32 %v478, 1.442695
    %v484 = vpow.pop %v483
    %v485 = vsel %vm296, %v480, 0.0
    %486 = vadd.xlane.f32.xlu0 %v485
    %v487 = vpop.xlane.xlu0 %486
    %v488 = vsel %vm296, %v482, 0.0
    %489 = vadd.xlane.f32.xlu0 %v488
    %v490 = vpop.xlane.xlu0 %489
    %v491 = vsel %vm303, %v484, 0.0
    %492 = vadd.xlane.f32.xlu0 %v491
    %v493 = vpop.xlane.xlu0 %492
    %v494 = vrcp.pop %v487
    %v495 = vrcp.pop %v490
    %v496 = vrcp.pop %v493
    %v497 = vmul.f32 %v480, %v494
    %v498 = vmul.f32 %v482, %v495
    %v499 = vmul.f32 %v484, %v496
    %v500 = vpack.c.bf16 %v498, %v497
    %v501 = vpack.c.bf16 %v499, %v499
    %v503 = vsel %vm296, %v500, 0
    %v506 = vsel %vm296, %v501, 0
    %508 = vmatprep.subr.bf16.mxu0 0
    %509 = vmatpush1.bf16.msra.mxu0 0
    %510 = vmatprep.subr.bf16.mxu0 0
    %511 = vmatpush1.bf16.msra.mxu0 0
    %512 = vmatprep.subr.bf16.mxu0 0
    %513 = vmatpush1.bf16.msra.mxu0 0
    %514 = vmatprep.subr.bf16.mxu0 0
    %515 = vmatpush1.bf16.msra.mxu0 0
    %516 = vmatprep.subr.bf16.mxu0 0
    %517 = vmatpush1.bf16.msra.mxu0 0
    %518 = vmatprep.subr.bf16.mxu0 0
    %519 = vmatpush1.bf16.msra.mxu0 0
    %520 = vmatprep.subr.bf16.mxu0 0
    %521 = vmatpush1.bf16.msra.mxu0 %v346
    %522 = vmatprep.subr.bf16.mxu0 0
    %523 = vmatpush1.bf16.msra.mxu0 %v334
    %524 = vmatprep.subr.bf16.mxu0 0
    %525 = vmatpush2.bf16.msra.mxu0 0
    %526 = vmatprep.subr.bf16.mxu0 0
    %527 = vmatpush2.bf16.msra.mxu0 0
    %528 = vmatprep.subr.bf16.mxu0 0
    %529 = vmatpush2.bf16.msra.mxu0 0
    %530 = vmatprep.subr.bf16.mxu0 0
    %531 = vmatpush2.bf16.msra.mxu0 0
    %532 = vmatprep.subr.bf16.mxu0 0
    %533 = vmatpush2.bf16.msra.mxu0 0
    %534 = vmatprep.subr.bf16.mxu0 0
    %535 = vmatpush2.bf16.msra.mxu0 0
    %536 = vmatprep.subr.bf16.mxu0 0
    %537 = vmatpush2.bf16.msra.mxu0 0
    %538 = vmatprep.subr.bf16.mxu0 0
    %539 = vmatpush2.bf16.msra.mxu0 0
    %540 = vmatprep.mubr.bf16.mxu0 0
    %541 = vmatmul.mubr.bf16.gmra.mxu0 %v503
    %v542 = vpop.f32.mrf.mxu0
    %v543 = vadd.f32 0.0, %v542
    %v544 = vpop.f32.mrf.mxu0
    %v545 = vpop.f32.mrf.mxu0
    %v546 = vadd.f32 0.0, %v545
    %v547 = vpop.f32.mrf.mxu0
    %548 = vmatprep.mubr.bf16.mxu0 0
    %549 = vmatmul.mubr.bf16.gmra.mxu0 %v506
    %v550 = vpop.f32.mrf.mxu0
    %v551 = vadd.f32 0.0, %v550
    %v552 = vpop.f32.mrf.mxu0
    %v553 = vpop.f32.mrf.mxu0
    %v554 = vpop.f32.mrf.mxu0
    %555 = vdwg.mxu0
    %v556 = vmul.f32 %v543, %v406
    %v557 = vmul.f32 %v546, %v406
    %v558 = vmul.f32 %v551, %v406
    %v559 = vadd.f32 %v399, %v556
    %v560 = vadd.f32 %v400, %v557
    %v561 = vadd.f32 %v401, %v558
    %v562 = vpack.c.bf16 %v560, %v559
    %v563 = vpack.c.bf16 %v561, %v561
    %v564 = vld [vmem:[%s7] sm:$0xf]
    %v565 = vld [vmem:[%s7 + $0x4] sm:$0xf]
    %v566 = vld [vmem:[%s7 + $0x8] sm:$0xf]
    %v567 = vld [vmem:[%s7 + $0xc] sm:$0xf]
    %v572 = vunpack.c.l.b16 %v564
    %v573 = vunpack.c.l.b16 %v565
    %v574 = vunpack.c.l.b16 %v566
    %v575 = vunpack.c.l.b16 %v567
    %v576 = vpack.c.b16 %v573, %v572
    %v577 = vpack.c.b16 %v575, %v574
    %v581 = vsel %vm75, %v562, 0
    %v584 = vsel %vm75, %v563, 0
    %586 = vmatprep.subr.bf16.mxu0 0
    %587 = vmatpush1.bf16.msra.mxu0 0
    %588 = vmatprep.subr.bf16.mxu0 0
    %589 = vmatpush1.bf16.msra.mxu0 0
    %590 = vmatprep.subr.bf16.mxu0 0
    %591 = vmatpush1.bf16.msra.mxu0 0
    %592 = vmatprep.subr.bf16.mxu0 0
    %593 = vmatpush1.bf16.msra.mxu0 0
    %594 = vmatprep.subr.bf16.mxu0 0
    %595 = vmatpush1.bf16.msra.mxu0 0
    %596 = vmatprep.subr.bf16.mxu0 0
    %597 = vmatpush1.bf16.msra.mxu0 0
    %598 = vmatprep.subr.bf16.mxu0 0
    %599 = vmatpush1.bf16.msra.mxu0 %v577
    %600 = vmatprep.subr.bf16.mxu0 0
    %601 = vmatpush1.bf16.msra.mxu0 %v576
    %602 = vmatprep.subr.bf16.mxu0 0
    %603 = vmatpush2.bf16.msra.mxu0 0
    %604 = vmatprep.subr.bf16.mxu0 0
    %605 = vmatpush2.bf16.msra.mxu0 0
    %606 = vmatprep.subr.bf16.mxu0 0
    %607 = vmatpush2.bf16.msra.mxu0 0
    %608 = vmatprep.subr.bf16.mxu0 0
    %609 = vmatpush2.bf16.msra.mxu0 0
    %610 = vmatprep.subr.bf16.mxu0 0
    %611 = vmatpush2.bf16.msra.mxu0 0
    %612 = vmatprep.subr.bf16.mxu0 0
    %613 = vmatpush2.bf16.msra.mxu0 0
    %614 = vmatprep.subr.bf16.mxu0 0
    %615 = vmatpush2.bf16.msra.mxu0 0
    %616 = vmatprep.subr.bf16.mxu0 0
    %617 = vmatpush2.bf16.msra.mxu0 0
    %618 = vmatprep.mubr.bf16.mxu0 0
    %619 = vmatmul.mubr.bf16.gmra.mxu0 %v581
    %v620 = vpop.f32.mrf.mxu0
    %v621 = vadd.f32 0.0, %v620
    %v622 = vpop.f32.mrf.mxu0
    %v623 = vpop.f32.mrf.mxu0
    %v624 = vadd.f32 0.0, %v623
    %v625 = vpop.f32.mrf.mxu0
    %626 = vmatprep.mubr.bf16.mxu0 0
    %627 = vmatmul.mubr.bf16.gmra.mxu0 %v584
    %v628 = vpop.f32.mrf.mxu0
    %v629 = vadd.f32 0.0, %v628
    %v630 = vpop.f32.mrf.mxu0
    %v631 = vpop.f32.mrf.mxu0
    %v632 = vpop.f32.mrf.mxu0
    %633 = vdwg.mxu0
    %v634 = vadd.f32 %v64, %v621
    %v635 = vadd.f32 %v65, %v624
    %v636 = vadd.f32 %v66, %v629
    %v637 = vld [vmem:[%s8] sm:$0x1]
    %v639 = vlaneseq
    %v640 = vshrl.u32 %v639, 7
    %v641 = vsub.s32 0, %v640
    %v642 = vrot.slane %v637, %v641
    %v644 = vadd.f32 %v634, %v642
    %v645 = vadd.f32 %v635, %v642
    %v646 = vadd.f32 %v636, %v642
    %v647 = vld [vmem:[%s9] sm:$0x1]
    %v648 = vld [vmem:[%s10] sm:$0x1]
    %v649 = vsel %vm75, %v644, 0.0
    %650 = vadd.xlane.f32.xlu0 %v649
    %v651 = vpop.xlane.xlu0 %650
    %v652 = vsel %vm75, %v645, 0.0
    %653 = vadd.xlane.f32.xlu0 %v652
    %v654 = vpop.xlane.xlu0 %653
    %v655 = vsel %vm82, %v646, 0.0
    %656 = vadd.xlane.f32.xlu0 %v655
    %v657 = vpop.xlane.xlu0 %656
    %v658 = vmul.f32 %v651, %v86
    %v659 = vmul.f32 %v654, %v86
    %v660 = vmul.f32 %v657, %v86
    %v661 = vsub.f32 %v644, %v658
    %v662 = vsub.f32 %v645, %v659
    %v663 = vsub.f32 %v646, %v660
    %v664 = vmul.f32 %v661, %v661
    %v665 = vmul.f32 %v662, %v662
    %v666 = vmul.f32 %v663, %v663
    %v667 = vsel %vm75, %v664, 0.0
    %668 = vadd.xlane.f32.xlu0 %v667
    %v669 = vpop.xlane.xlu0 %668
    %v670 = vsel %vm75, %v665, 0.0
    %671 = vadd.xlane.f32.xlu0 %v670
    %v672 = vpop.xlane.xlu0 %671
    %v673 = vsel %vm82, %v666, 0.0
    %674 = vadd.xlane.f32.xlu0 %v673
    %v675 = vpop.xlane.xlu0 %674
    %v676 = vmul.f32 %v669, %v86
    %v677 = vmul.f32 %v672, %v86
    %v678 = vmul.f32 %v675, %v86
    %v679 = vadd.f32 %v676, 1e-05
    %v680 = vadd.f32 %v677, 1e-05
    %v681 = vadd.f32 %v678, 1e-05
    %v682 = vrsqrt.pop %v679
    %v683 = vrsqrt.pop %v680
    %v684 = vrsqrt.pop %v681
    %v685 = vmul.f32 %v661, %v682
    %v686 = vmul.f32 %v662, %v683
    %v687 = vmul.f32 %v663, %v684
    %v689 = vlaneseq
    %v690 = vshrl.u32 %v689, 7
    %v691 = vsub.s32 0, %v690
    %v692 = vrot.slane %v647, %v691
    %v694 = vmul.f32 %v685, %v692
    %v695 = vmul.f32 %v686, %v692
    %v696 = vmul.f32 %v687, %v692
    %v698 = vlaneseq
    %v699 = vshrl.u32 %v698, 7
    %v700 = vsub.s32 0, %v699
    %v701 = vrot.slane %v648, %v700
    %v703 = vadd.f32 %v694, %v701
    %v704 = vadd.f32 %v695, %v701
    %v705 = vadd.f32 %v696, %v701
    %v706 = vpack.c.bf16 %v704, %v703
    %v707 = vpack.c.bf16 %v705, %v705
    %v708 = vld [vmem:[%s11] sm:$0xf]
    %v709 = vld [vmem:[%s11 + $0x4] sm:$0xf]
    %v710 = vld [vmem:[%s11 + $0x8] sm:$0xf]
    %v711 = vld [vmem:[%s11 + $0xc] sm:$0xf]
    %v712 = vld [vmem:[%s12] sm:$0x1]
    %v714 = vlaneseq
    %v715 = vshrl.u32 %v714, 7
    %v716 = vsub.s32 0, %v715
    %v717 = vrot.slane %v712, %v716
    %v723 = vunpack.c.l.b16 %v708
    %v724 = vunpack.c.l.b16 %v709
    %v725 = vunpack.c.l.b16 %v710
    %v726 = vunpack.c.l.b16 %v711
    %v727 = vpack.c.b16 %v724, %v723
    %v728 = vpack.c.b16 %v726, %v725
    %v732 = vsel %vm75, %v706, 0
    %v735 = vsel %vm75, %v707, 0
    %737 = vmatprep.subr.bf16.mxu0 0
    %738 = vmatpush1.bf16.msra.mxu0 0
    %739 = vmatprep.subr.bf16.mxu0 0
    %740 = vmatpush1.bf16.msra.mxu0 0
    %741 = vmatprep.subr.bf16.mxu0 0
    %742 = vmatpush1.bf16.msra.mxu0 0
    %743 = vmatprep.subr.bf16.mxu0 0
    %744 = vmatpush1.bf16.msra.mxu0 0
    %745 = vmatprep.subr.bf16.mxu0 0
    %746 = vmatpush1.bf16.msra.mxu0 0
    %747 = vmatprep.subr.bf16.mxu0 0
    %748 = vmatpush1.bf16.msra.mxu0 0
    %749 = vmatprep.subr.bf16.mxu0 0
    %750 = vmatpush1.bf16.msra.mxu0 %v728
    %751 = vmatprep.subr.bf16.mxu0 0
    %752 = vmatpush1.bf16.msra.mxu0 %v727
    %753 = vmatprep.subr.bf16.mxu0 0
    %754 = vmatpush2.bf16.msra.mxu0 0
    %755 = vmatprep.subr.bf16.mxu0 0
    %756 = vmatpush2.bf16.msra.mxu0 0
    %757 = vmatprep.subr.bf16.mxu0 0
    %758 = vmatpush2.bf16.msra.mxu0 0
    %759 = vmatprep.subr.bf16.mxu0 0
    %760 = vmatpush2.bf16.msra.mxu0 0
    %761 = vmatprep.subr.bf16.mxu0 0
    %762 = vmatpush2.bf16.msra.mxu0 0
    %763 = vmatprep.subr.bf16.mxu0 0
    %764 = vmatpush2.bf16.msra.mxu0 0
    %765 = vmatprep.subr.bf16.mxu0 0
    %766 = vmatpush2.bf16.msra.mxu0 0
    %767 = vmatprep.subr.bf16.mxu0 0
    %768 = vmatpush2.bf16.msra.mxu0 0
    %769 = vmatprep.mubr.bf16.mxu0 0
    %770 = vmatmul.mubr.bf16.gmra.mxu0 %v732
    %v771 = vpop.f32.mrf.mxu0
    %v772 = vadd.f32 %v717, %v771
    %v773 = vpop.f32.mrf.mxu0
    %v774 = vpop.f32.mrf.mxu0
    %v775 = vadd.f32 %v717, %v774
    %v776 = vpop.f32.mrf.mxu0
    %777 = vmatprep.mubr.bf16.mxu0 0
    %778 = vmatmul.mubr.bf16.gmra.mxu0 %v735
    %v779 = vpop.f32.mrf.mxu0
    %v780 = vadd.f32 %v717, %v779
    %v781 = vpop.f32.mrf.mxu0
    %v782 = vpop.f32.mrf.mxu0
    %v783 = vpop.f32.mrf.mxu0
    %784 = vdwg.mxu0
    %v785 = vmul.f32 %v772, %v772
    %v786 = vmul.f32 %v775, %v775
    %v787 = vmul.f32 %v780, %v780
    %v788 = vmul.f32 %v772, %v785
    %v789 = vmul.f32 %v775, %v786
    %v790 = vmul.f32 %v780, %v787
    %v791 = vmul.f32 %v788, 0.044715
    %v792 = vmul.f32 %v789, 0.044715
    %v793 = vmul.f32 %v790, 0.044715
    %v794 = vadd.f32 %v772, %v791
    %v795 = vadd.f32 %v775, %v792
    %v796 = vadd.f32 %v780, %v793
    %v797 = vmul.f32 %v794, 0.7978846
    %v798 = vmul.f32 %v795, 0.7978846
    %v799 = vmul.f32 %v796, 0.7978846
    %v800 = vtanh.pop %v797
    %v801 = vtanh.pop %v798
    %v802 = vtanh.pop %v799
    %v803 = vadd.f32 %v800, 1.0
    %v804 = vadd.f32 %v801, 1.0
    %v805 = vadd.f32 %v802, 1.0
    %v806 = vmul.f32 %v803, 0.5
    %v807 = vmul.f32 %v804, 0.5
    %v808 = vmul.f32 %v805, 0.5
    %v809 = vmul.f32 %v772, %v806
    %v810 = vmul.f32 %v775, %v807
    %v811 = vmul.f32 %v780, %v808
    %v812 = vpack.c.bf16 %v810, %v809
    %v813 = vpack.c.bf16 %v811, %v811
    %v814 = vld [vmem:[%s13] sm:$0xf]
    %v815 = vld [vmem:[%s13 + $0x4] sm:$0xf]
    %v816 = vld [vmem:[%s13 + $0x8] sm:$0xf]
    %v817 = vld [vmem:[%s13 + $0xc] sm:$0xf]
    %v818 = vld [vmem:[%s13 + $0x10] sm:$0xf]
    %v819 = vld [vmem:[%s13 + $0x14] sm:$0xf]
    %v820 = vld [vmem:[%s13 + $0x18] sm:$0xf]
    %v821 = vld [vmem:[%s13 + $0x1c] sm:$0xf]
    %v822 = vld [vmem:[%s13 + $0x20] sm:$0xf]
    %v823 = vld [vmem:[%s13 + $0x24] sm:$0xf]
    %v824 = vld [vmem:[%s13 + $0x28] sm:$0xf]
    %v825 = vld [vmem:[%s13 + $0x2c] sm:$0xf]
    %v826 = vld [vmem:[%s13 + $0x30] sm:$0xf]
    %v827 = vld [vmem:[%s13 + $0x34] sm:$0xf]
    %v828 = vld [vmem:[%s13 + $0x38] sm:$0xf]
    %v829 = vld [vmem:[%s13 + $0x3c] sm:$0xf]
    %v830 = vld [vmem:[%s14] sm:$0x1]
    %v832 = vlaneseq
    %v833 = vshrl.u32 %v832, 7
    %v834 = vsub.s32 0, %v833
    %v835 = vrot.slane %v830, %v834
    %v853 = vunpack.c.l.b16 %v814
    %v854 = vunpack.c.l.b16 %v815
    %v855 = vunpack.c.l.b16 %v816
    %v856 = vunpack.c.l.b16 %v817
    %v857 = vunpack.c.l.b16 %v818
    %v858 = vunpack.c.l.b16 %v819
    %v859 = vunpack.c.l.b16 %v820
    %v860 = vunpack.c.l.b16 %v821
    %v861 = vunpack.c.l.b16 %v822
    %v862 = vunpack.c.l.b16 %v823
    %v863 = vunpack.c.l.b16 %v824
    %v864 = vunpack.c.l.b16 %v825
    %v865 = vunpack.c.l.b16 %v826
    %v866 = vunpack.c.l.b16 %v827
    %v867 = vunpack.c.l.b16 %v828
    %v868 = vunpack.c.l.b16 %v829
    %v869 = vpack.c.b16 %v854, %v853
    %v870 = vpack.c.b16 %v856, %v855
    %v871 = vpack.c.b16 %v858, %v857
    %v872 = vpack.c.b16 %v860, %v859
    %v873 = vpack.c.b16 %v862, %v861
    %v874 = vpack.c.b16 %v864, %v863
    %v875 = vpack.c.b16 %v866, %v865
    %v876 = vpack.c.b16 %v868, %v867
    %885 = vmatprep.subr.bf16.mxu0 0
    %886 = vmatpush1.bf16.msra.mxu0 %v876
    %887 = vmatprep.subr.bf16.mxu0 0
    %888 = vmatpush1.bf16.msra.mxu0 %v875
    %889 = vmatprep.subr.bf16.mxu0 0
    %890 = vmatpush1.bf16.msra.mxu0 %v874
    %891 = vmatprep.subr.bf16.mxu0 0
    %892 = vmatpush1.bf16.msra.mxu0 %v873
    %893 = vmatprep.subr.bf16.mxu0 0
    %894 = vmatpush1.bf16.msra.mxu0 %v872
    %895 = vmatprep.subr.bf16.mxu0 0
    %896 = vmatpush1.bf16.msra.mxu0 %v871
    %897 = vmatprep.subr.bf16.mxu0 0
    %898 = vmatpush1.bf16.msra.mxu0 %v870
    %899 = vmatprep.subr.bf16.mxu0 0
    %900 = vmatpush1.bf16.msra.mxu0 %v869
    %901 = vmatprep.subr.bf16.mxu0 0
    %902 = vmatpush2.bf16.msra.mxu0 0
    %903 = vmatprep.subr.bf16.mxu0 0
    %904 = vmatpush2.bf16.msra.mxu0 0
    %905 = vmatprep.subr.bf16.mxu0 0
    %906 = vmatpush2.bf16.msra.mxu0 0
    %907 = vmatprep.subr.bf16.mxu0 0
    %908 = vmatpush2.bf16.msra.mxu0 0
    %909 = vmatprep.subr.bf16.mxu0 0
    %910 = vmatpush2.bf16.msra.mxu0 0
    %911 = vmatprep.subr.bf16.mxu0 0
    %912 = vmatpush2.bf16.msra.mxu0 0
    %913 = vmatprep.subr.bf16.mxu0 0
    %914 = vmatpush2.bf16.msra.mxu0 0
    %915 = vmatprep.subr.bf16.mxu0 0
    %916 = vmatpush2.bf16.msra.mxu0 0
    %917 = vmatprep.mubr.bf16.mxu0 0
    %918 = vmatmul.mubr.bf16.gmra.mxu0 %v812
    %v919 = vpop.f32.mrf.mxu0
    %v920 = vadd.f32 %v835, %v919
    %v921 = vpop.f32.mrf.mxu0
    %v922 = vpop.f32.mrf.mxu0
    %v923 = vadd.f32 %v835, %v922
    %v924 = vpop.f32.mrf.mxu0
    %925 = vmatprep.mubr.bf16.mxu0 0
    %926 = vmatmul.mubr.bf16.gmra.mxu0 %v813
    %v927 = vpop.f32.mrf.mxu0
    %v928 = vadd.f32 %v835, %v927
    %v929 = vpop.f32.mrf.mxu0
    %v930 = vpop.f32.mrf.mxu0
    %v931 = vpop.f32.mrf.mxu0
    %932 = vdwg.mxu0
    %v933 = vadd.f32 %v644, %v920
    %v934 = vadd.f32 %v645, %v923
    %v935 = vadd.f32 %v646, %v928
    %s936 = scalar_lea.vmem %s3, 1
    %v937 = vld [vmem:[%s936] sm:$0x1]
    %s938 = scalar_lea.vmem %s4, 1
    %v939 = vld [vmem:[%s938] sm:$0x1]
    %v940 = vsel %vm75, %v933, 0.0
    %941 = vadd.xlane.f32.xlu0 %v940
    %v942 = vpop.xlane.xlu0 %941
    %v943 = vsel %vm75, %v934, 0.0
    %944 = vadd.xlane.f32.xlu0 %v943
    %v945 = vpop.xlane.xlu0 %944
    %v946 = vsel %vm82, %v935, 0.0
    %947 = vadd.xlane.f32.xlu0 %v946
    %v948 = vpop.xlane.xlu0 %947
    %v949 = vmul.f32 %v942, %v86
    %v950 = vmul.f32 %v945, %v86
    %v951 = vmul.f32 %v948, %v86
    %v952 = vsub.f32 %v933, %v949
    %v953 = vsub.f32 %v934, %v950
    %v954 = vsub.f32 %v935, %v951
    %v955 = vmul.f32 %v952, %v952
    %v956 = vmul.f32 %v953, %v953
    %v957 = vmul.f32 %v954, %v954
    %v958 = vsel %vm75, %v955, 0.0
    %959 = vadd.xlane.f32.xlu0 %v958
    %v960 = vpop.xlane.xlu0 %959
    %v961 = vsel %vm75, %v956, 0.0
    %962 = vadd.xlane.f32.xlu0 %v961
    %v963 = vpop.xlane.xlu0 %962
    %v964 = vsel %vm82, %v957, 0.0
    %965 = vadd.xlane.f32.xlu0 %v964
    %v966 = vpop.xlane.xlu0 %965
    %v967 = vmul.f32 %v960, %v86
    %v968 = vmul.f32 %v963, %v86
    %v969 = vmul.f32 %v966, %v86
    %v970 = vadd.f32 %v967, 1e-05
    %v971 = vadd.f32 %v968, 1e-05
    %v972 = vadd.f32 %v969, 1e-05
    %v973 = vrsqrt.pop %v970
    %v974 = vrsqrt.pop %v971
    %v975 = vrsqrt.pop %v972
    %v976 = vmul.f32 %v952, %v973
    %v977 = vmul.f32 %v953, %v974
    %v978 = vmul.f32 %v954, %v975
    %v980 = vlaneseq
    %v981 = vshrl.u32 %v980, 7
    %v982 = vsub.s32 0, %v981
    %v983 = vrot.slane %v937, %v982
    %v985 = vmul.f32 %v976, %v983
    %v986 = vmul.f32 %v977, %v983
    %v987 = vmul.f32 %v978, %v983
    %v989 = vlaneseq
    %v990 = vshrl.u32 %v989, 7
    %v991 = vsub.s32 0, %v990
    %v992 = vrot.slane %v939, %v991
    %v994 = vadd.f32 %v985, %v992
    %v995 = vadd.f32 %v986, %v992
    %v996 = vadd.f32 %v987, %v992
    %v997 = vpack.c.bf16 %v995, %v994
    %v998 = vpack.c.bf16 %v996, %v996
    %s999 = scalar_lea.vmem %s5, 16
    %v1000 = vld [vmem:[%s999] sm:$0xf]
    %v1001 = vld [vmem:[%s999 + $0x4] sm:$0xf]
    %v1002 = vld [vmem:[%s999 + $0x8] sm:$0xf]
    %v1003 = vld [vmem:[%s999 + $0xc] sm:$0xf]
    %s1004 = scalar_lea.vmem %s6, 1
    %v1005 = vld [vmem:[%s1004] sm:$0x1]
    %v1007 = vlaneseq
    %v1008 = vshrl.u32 %v1007, 7
    %v1009 = vsub.s32 0, %v1008
    %v1010 = vrot.slane %v1005, %v1009
    %v1016 = vunpack.c.l.b16 %v1000
    %v1017 = vunpack.c.l.b16 %v1001
    %v1018 = vunpack.c.l.b16 %v1002
    %v1019 = vunpack.c.l.b16 %v1003
    %v1020 = vpack.c.b16 %v1017, %v1016
    %v1021 = vpack.c.b16 %v1019, %v1018
    %v1025 = vsel %vm75, %v997, 0
    %v1028 = vsel %vm75, %v998, 0
    %1030 = vmatprep.subr.bf16.mxu0 0
    %1031 = vmatpush1.bf16.msra.mxu0 0
    %1032 = vmatprep.subr.bf16.mxu0 0
    %1033 = vmatpush1.bf16.msra.mxu0 0
    %1034 = vmatprep.subr.bf16.mxu0 0
    %1035 = vmatpush1.bf16.msra.mxu0 0
    %1036 = vmatprep.subr.bf16.mxu0 0
    %1037 = vmatpush1.bf16.msra.mxu0 0
    %1038 = vmatprep.subr.bf16.mxu0 0
    %1039 = vmatpush1.bf16.msra.mxu0 0
    %1040 = vmatprep.subr.bf16.mxu0 0
    %1041 = vmatpush1.bf16.msra.mxu0 0
    %1042 = vmatprep.subr.bf16.mxu0 0
    %1043 = vmatpush1.bf16.msra.mxu0 %v1021
    %1044 = vmatprep.subr.bf16.mxu0 0
    %1045 = vmatpush1.bf16.msra.mxu0 %v1020
    %1046 = vmatprep.subr.bf16.mxu0 0
    %1047 = vmatpush2.bf16.msra.mxu0 0
    %1048 = vmatprep.subr.bf16.mxu0 0
    %1049 = vmatpush2.bf16.msra.mxu0 0
    %1050 = vmatprep.subr.bf16.mxu0 0
    %1051 = vmatpush2.bf16.msra.mxu0 0
    %1052 = vmatprep.subr.bf16.mxu0 0
    %1053 = vmatpush2.bf16.msra.mxu0 0
    %1054 = vmatprep.subr.bf16.mxu0 0
    %1055 = vmatpush2.bf16.msra.mxu0 0
    %1056 = vmatprep.subr.bf16.mxu0 0
    %1057 = vmatpush2.bf16.msra.mxu0 0
    %1058 = vmatprep.subr.bf16.mxu0 0
    %1059 = vmatpush2.bf16.msra.mxu0 0
    %1060 = vmatprep.subr.bf16.mxu0 0
    %1061 = vmatpush2.bf16.msra.mxu0 0
    %1062 = vmatprep.mubr.bf16.mxu0 0
    %1063 = vmatmul.mubr.bf16.gmra.mxu0 %v1025
    %v1064 = vpop.f32.mrf.mxu0
    %v1065 = vadd.f32 %v1010, %v1064
    %v1066 = vpop.f32.mrf.mxu0
    %v1067 = vpop.f32.mrf.mxu0
    %v1068 = vadd.f32 %v1010, %v1067
    %v1069 = vpop.f32.mrf.mxu0
    %1070 = vmatprep.mubr.bf16.mxu0 0
    %1071 = vmatmul.mubr.bf16.gmra.mxu0 %v1028
    %v1072 = vpop.f32.mrf.mxu0
    %v1073 = vadd.f32 %v1010, %v1072
    %v1074 = vpop.f32.mrf.mxu0
    %v1075 = vpop.f32.mrf.mxu0
    %v1076 = vpop.f32.mrf.mxu0
    %1077 = vdwg.mxu0
    %v1078 = vmul.f32 %v1065, 0.25
    %v1079 = vmul.f32 %v1068, 0.25
    %v1080 = vmul.f32 %v1073, 0.25
    %v1081 = vpack.c.bf16 %v1068, %v1065
    %v1082 = vpack.c.bf16 %v1073, %v1073
    %v1083 = vmul.f32 %v1078, %v223
    %v1084 = vmul.f32 %v1079, %v223
    %v1085 = vmul.f32 %v1080, %v223
    %v1086 = vpack.c.bf16 %v1084, %v1083
    %v1087 = vpack.c.bf16 %v1085, %v1085
    %1090 = vrot.lane.b32.xlu0 %v1081, 96
    %v1091 = vpop.permute.xlu0 %1090
    %1092 = vrot.lane.b32.xlu0 %v1082, 96
    %v1093 = vpop.permute.xlu0 %1092
    %v1095 = vsel %vm75, %v1086, 0
    %v1098 = vsel %vm75, %v1087, 0
    %v1101 = vsel %vm75, %v1091, 0
    %v1104 = vsel %vm75, %v1093, 0
    %1106 = vmatprep.subr.bf16.mxu0 0
    %1107 = vmatpush1.bf16.xpose.msra.mxu0 0
    %1108 = vmatprep.subr.bf16.mxu0 0
    %1109 = vmatpush1.bf16.xpose.msra.mxu0 0
    %1110 = vmatprep.subr.bf16.mxu0 0
    %1111 = vmatpush1.bf16.xpose.msra.mxu0 0
    %1112 = vmatprep.subr.bf16.mxu0 0
    %1113 = vmatpush1.bf16.xpose.msra.mxu0 0
    %1114 = vmatprep.subr.bf16.mxu0 0
    %1115 = vmatpush1.bf16.xpose.msra.mxu0 0
    %1116 = vmatprep.subr.bf16.mxu0 0
    %1117 = vmatpush1.bf16.xpose.msra.mxu0 0
    %1118 = vmatprep.subr.bf16.mxu0 0
    %1119 = vmatpush1.bf16.xpose.msra.mxu0 %v1104
    %1120 = vmatprep.subr.bf16.mxu0 0
    %1121 = vmatpush1.bf16.xpose.msra.mxu0 %v1101
    %1122 = vmatprep.subr.bf16.mxu0 0
    %1123 = vmatpush2.bf16.xpose.msra.mxu0 0
    %1124 = vmatprep.subr.bf16.mxu0 0
    %1125 = vmatpush2.bf16.xpose.msra.mxu0 0
    %1126 = vmatprep.subr.bf16.mxu0 0
    %1127 = vmatpush2.bf16.xpose.msra.mxu0 0
    %1128 = vmatprep.subr.bf16.mxu0 0
    %1129 = vmatpush2.bf16.xpose.msra.mxu0 0
    %1130 = vmatprep.subr.bf16.mxu0 0
    %1131 = vmatpush2.bf16.xpose.msra.mxu0 0
    %1132 = vmatprep.subr.bf16.mxu0 0
    %1133 = vmatpush2.bf16.xpose.msra.mxu0 0
    %1134 = vmatprep.subr.bf16.mxu0 0
    %1135 = vmatpush2.bf16.xpose.msra.mxu0 0
    %1136 = vmatprep.subr.bf16.mxu0 0
    %1137 = vmatpush2.bf16.xpose.msra.mxu0 0
    %1138 = vmatprep.mubr.bf16.mxu0 0
    %1139 = vmatmul.mubr.bf16.gmra.mxu0 %v1095
    %v1140 = vpop.f32.mrf.mxu0
    %v1141 = vadd.f32 %v67, %v1140
    %v1142 = vpop.f32.mrf.mxu0
    %v1143 = vpop.f32.mrf.mxu0
    %v1144 = vadd.f32 %v68, %v1143
    %v1145 = vpop.f32.mrf.mxu0
    %1146 = vmatprep.mubr.bf16.mxu0 0
    %1147 = vmatmul.mubr.bf16.gmra.mxu0 %v1098
    %v1148 = vpop.f32.mrf.mxu0
    %v1149 = vadd.f32 %v69, %v1148
    %v1150 = vpop.f32.mrf.mxu0
    %v1151 = vpop.f32.mrf.mxu0
    %v1152 = vpop.f32.mrf.mxu0
    %1153 = vdwg.mxu0
    %v1154 = vsel %vm296, %v1141, -inf
    %1155 = vmax.xlane.f32.xlu0 %v1154
    %v1156 = vpop.xlane.xlu0 %1155
    %v1157 = vsel %vm296, %v1144, -inf
    %1158 = vmax.xlane.f32.xlu0 %v1157
    %v1159 = vpop.xlane.xlu0 %1158
    %v1160 = vsel %vm303, %v1149, -inf
    %1161 = vmax.xlane.f32.xlu0 %v1160
    %v1162 = vpop.xlane.xlu0 %1161
    %v1163 = vsub.f32 %v1141, %v1156
    %v1164 = vsub.f32 %v1144, %v1159
    %v1165 = vsub.f32 %v1149, %v1162
    %v1166 = vmul.f32 %v1163, 1.442695
    %v1167 = vpow.pop %v1166
    %v1168 = vmul.f32 %v1164, 1.442695
    %v1169 = vpow.pop %v1168
    %v1170 = vmul.f32 %v1165, 1.442695
    %v1171 = vpow.pop %v1170
    %v1172 = vsel %vm296, %v1167, 0.0
    %1173 = vadd.xlane.f32.xlu0 %v1172
    %v1174 = vpop.xlane.xlu0 %1173
    %v1175 = vsel %vm296, %v1169, 0.0
    %1176 = vadd.xlane.f32.xlu0 %v1175
    %v1177 = vpop.xlane.xlu0 %1176
    %v1178 = vsel %vm303, %v1171, 0.0
    %1179 = vadd.xlane.f32.xlu0 %v1178
    %v1180 = vpop.xlane.xlu0 %1179
    %v1181 = vrcp.pop %v1174
    %v1182 = vrcp.pop %v1177
    %v1183 = vrcp.pop %v1180
    %v1184 = vmul.f32 %v1167, %v1181
    %v1185 = vmul.f32 %v1169, %v1182
    %v1186 = vmul.f32 %v1171, %v1183
    %v1187 = vpack.c.bf16 %v1185, %v1184
    %v1188 = vpack.c.bf16 %v1186, %v1186
    %1189 = vrot.lane.b32.xlu0 %v1081, 64
    %v1190 = vpop.permute.xlu0 %1189
    %1191 = vrot.lane.b32.xlu0 %v1082, 64
    %v1192 = vpop.permute.xlu0 %1191
    %v1195 = vsel %vm296, %v1187, 0
    %v1198 = vsel %vm296, %v1188, 0
    %v1201 = vsel %vm344, %v1192, 0
    %1203 = vmatprep.subr.bf16.mxu0 0
    %1204 = vmatpush1.bf16.msra.mxu0 0
    %1205 = vmatprep.subr.bf16.mxu0 0
    %1206 = vmatpush1.bf16.msra.mxu0 0
    %1207 = vmatprep.subr.bf16.mxu0 0
    %1208 = vmatpush1.bf16.msra.mxu0 0
    %1209 = vmatprep.subr.bf16.mxu0 0
    %1210 = vmatpush1.bf16.msra.mxu0 0
    %1211 = vmatprep.subr.bf16.mxu0 0
    %1212 = vmatpush1.bf16.msra.mxu0 0
    %1213 = vmatprep.subr.bf16.mxu0 0
    %1214 = vmatpush1.bf16.msra.mxu0 0
    %1215 = vmatprep.subr.bf16.mxu0 0
    %1216 = vmatpush1.bf16.msra.mxu0 %v1201
    %1217 = vmatprep.subr.bf16.mxu0 0
    %1218 = vmatpush1.bf16.msra.mxu0 %v1190
    %1219 = vmatprep.subr.bf16.mxu0 0
    %1220 = vmatpush2.bf16.msra.mxu0 0
    %1221 = vmatprep.subr.bf16.mxu0 0
    %1222 = vmatpush2.bf16.msra.mxu0 0
    %1223 = vmatprep.subr.bf16.mxu0 0
    %1224 = vmatpush2.bf16.msra.mxu0 0
    %1225 = vmatprep.subr.bf16.mxu0 0
    %1226 = vmatpush2.bf16.msra.mxu0 0
    %1227 = vmatprep.subr.bf16.mxu0 0
    %1228 = vmatpush2.bf16.msra.mxu0 0
    %1229 = vmatprep.subr.bf16.mxu0 0
    %1230 = vmatpush2.bf16.msra.mxu0 0
    %1231 = vmatprep.subr.bf16.mxu0 0
    %1232 = vmatpush2.bf16.msra.mxu0 0
    %1233 = vmatprep.subr.bf16.mxu0 0
    %1234 = vmatpush2.bf16.msra.mxu0 0
    %1235 = vmatprep.mubr.bf16.mxu0 0
    %1236 = vmatmul.mubr.bf16.gmra.mxu0 %v1195
    %v1237 = vpop.f32.mrf.mxu0
    %v1238 = vadd.f32 0.0, %v1237
    %v1239 = vpop.f32.mrf.mxu0
    %v1240 = vpop.f32.mrf.mxu0
    %v1241 = vadd.f32 0.0, %v1240
    %v1242 = vpop.f32.mrf.mxu0
    %1243 = vmatprep.mubr.bf16.mxu0 0
    %1244 = vmatmul.mubr.bf16.gmra.mxu0 %v1198
    %v1245 = vpop.f32.mrf.mxu0
    %v1246 = vadd.f32 0.0, %v1245
    %v1247 = vpop.f32.mrf.mxu0
    %v1248 = vpop.f32.mrf.mxu0
    %v1249 = vpop.f32.mrf.mxu0
    %1250 = vdwg.mxu0
    %v1251 = vmul.f32 %v1238, %v223
    %v1252 = vmul.f32 %v1241, %v223
    %v1253 = vmul.f32 %v1246, %v223
    %v1254 = vadd.f32 %v1251, 0.0
    %v1255 = vadd.f32 %v1252, 0.0
    %v1256 = vadd.f32 %v1253, 0.0
    %v1257 = vmul.f32 %v1078, %v406
    %v1258 = vmul.f32 %v1079, %v406
    %v1259 = vmul.f32 %v1080, %v406
    %v1260 = vpack.c.bf16 %v1258, %v1257
    %v1261 = vpack.c.bf16 %v1259, %v1259
    %v1263 = vsel %vm75, %v1260, 0
    %v1266 = vsel %vm75, %v1261, 0
    %1268 = vmatprep.subr.bf16.mxu0 0
    %1269 = vmatpush1.bf16.xpose.msra.mxu0 0
    %1270 = vmatprep.subr.bf16.mxu0 0
    %1271 = vmatpush1.bf16.xpose.msra.mxu0 0
    %1272 = vmatprep.subr.bf16.mxu0 0
    %1273 = vmatpush1.bf16.xpose.msra.mxu0 0
    %1274 = vmatprep.subr.bf16.mxu0 0
    %1275 = vmatpush1.bf16.xpose.msra.mxu0 0
    %1276 = vmatprep.subr.bf16.mxu0 0
    %1277 = vmatpush1.bf16.xpose.msra.mxu0 0
    %1278 = vmatprep.subr.bf16.mxu0 0
    %1279 = vmatpush1.bf16.xpose.msra.mxu0 0
    %1280 = vmatprep.subr.bf16.mxu0 0
    %1281 = vmatpush1.bf16.xpose.msra.mxu0 %v1104
    %1282 = vmatprep.subr.bf16.mxu0 0
    %1283 = vmatpush1.bf16.xpose.msra.mxu0 %v1101
    %1284 = vmatprep.subr.bf16.mxu0 0
    %1285 = vmatpush2.bf16.xpose.msra.mxu0 0
    %1286 = vmatprep.subr.bf16.mxu0 0
    %1287 = vmatpush2.bf16.xpose.msra.mxu0 0
    %1288 = vmatprep.subr.bf16.mxu0 0
    %1289 = vmatpush2.bf16.xpose.msra.mxu0 0
    %1290 = vmatprep.subr.bf16.mxu0 0
    %1291 = vmatpush2.bf16.xpose.msra.mxu0 0
    %1292 = vmatprep.subr.bf16.mxu0 0
    %1293 = vmatpush2.bf16.xpose.msra.mxu0 0
    %1294 = vmatprep.subr.bf16.mxu0 0
    %1295 = vmatpush2.bf16.xpose.msra.mxu0 0
    %1296 = vmatprep.subr.bf16.mxu0 0
    %1297 = vmatpush2.bf16.xpose.msra.mxu0 0
    %1298 = vmatprep.subr.bf16.mxu0 0
    %1299 = vmatpush2.bf16.xpose.msra.mxu0 0
    %1300 = vmatprep.mubr.bf16.mxu0 0
    %1301 = vmatmul.mubr.bf16.gmra.mxu0 %v1263
    %v1302 = vpop.f32.mrf.mxu0
    %v1303 = vadd.f32 %v67, %v1302
    %v1304 = vpop.f32.mrf.mxu0
    %v1305 = vpop.f32.mrf.mxu0
    %v1306 = vadd.f32 %v68, %v1305
    %v1307 = vpop.f32.mrf.mxu0
    %1308 = vmatprep.mubr.bf16.mxu0 0
    %1309 = vmatmul.mubr.bf16.gmra.mxu0 %v1266
    %v1310 = vpop.f32.mrf.mxu0
    %v1311 = vadd.f32 %v69, %v1310
    %v1312 = vpop.f32.mrf.mxu0
    %v1313 = vpop.f32.mrf.mxu0
    %v1314 = vpop.f32.mrf.mxu0
    %1315 = vdwg.mxu0
    %v1316 = vsel %vm296, %v1303, -inf
    %1317 = vmax.xlane.f32.xlu0 %v1316
    %v1318 = vpop.xlane.xlu0 %1317
    %v1319 = vsel %vm296, %v1306, -inf
    %1320 = vmax.xlane.f32.xlu0 %v1319
    %v1321 = vpop.xlane.xlu0 %1320
    %v1322 = vsel %vm303, %v1311, -inf
    %1323 = vmax.xlane.f32.xlu0 %v1322
    %v1324 = vpop.xlane.xlu0 %1323
    %v1325 = vsub.f32 %v1303, %v1318
    %v1326 = vsub.f32 %v1306, %v1321
    %v1327 = vsub.f32 %v1311, %v1324
    %v1328 = vmul.f32 %v1325, 1.442695
    %v1329 = vpow.pop %v1328
    %v1330 = vmul.f32 %v1326, 1.442695
    %v1331 = vpow.pop %v1330
    %v1332 = vmul.f32 %v1327, 1.442695
    %v1333 = vpow.pop %v1332
    %v1334 = vsel %vm296, %v1329, 0.0
    %1335 = vadd.xlane.f32.xlu0 %v1334
    %v1336 = vpop.xlane.xlu0 %1335
    %v1337 = vsel %vm296, %v1331, 0.0
    %1338 = vadd.xlane.f32.xlu0 %v1337
    %v1339 = vpop.xlane.xlu0 %1338
    %v1340 = vsel %vm303, %v1333, 0.0
    %1341 = vadd.xlane.f32.xlu0 %v1340
    %v1342 = vpop.xlane.xlu0 %1341
    %v1343 = vrcp.pop %v1336
    %v1344 = vrcp.pop %v1339
    %v1345 = vrcp.pop %v1342
    %v1346 = vmul.f32 %v1329, %v1343
    %v1347 = vmul.f32 %v1331, %v1344
    %v1348 = vmul.f32 %v1333, %v1345
    %v1349 = vpack.c.bf16 %v1347, %v1346
    %v1350 = vpack.c.bf16 %v1348, %v1348
    %v1352 = vsel %vm296, %v1349, 0
    %v1355 = vsel %vm296, %v1350, 0
    %1357 = vmatprep.subr.bf16.mxu0 0
    %1358 = vmatpush1.bf16.msra.mxu0 0
    %1359 = vmatprep.subr.bf16.mxu0 0
    %1360 = vmatpush1.bf16.msra.mxu0 0
    %1361 = vmatprep.subr.bf16.mxu0 0
    %1362 = vmatpush1.bf16.msra.mxu0 0
    %1363 = vmatprep.subr.bf16.mxu0 0
    %1364 = vmatpush1.bf16.msra.mxu0 0
    %1365 = vmatprep.subr.bf16.mxu0 0
    %1366 = vmatpush1.bf16.msra.mxu0 0
    %1367 = vmatprep.subr.bf16.mxu0 0
    %1368 = vmatpush1.bf16.msra.mxu0 0
    %1369 = vmatprep.subr.bf16.mxu0 0
    %1370 = vmatpush1.bf16.msra.mxu0 %v1201
    %1371 = vmatprep.subr.bf16.mxu0 0
    %1372 = vmatpush1.bf16.msra.mxu0 %v1190
    %1373 = vmatprep.subr.bf16.mxu0 0
    %1374 = vmatpush2.bf16.msra.mxu0 0
    %1375 = vmatprep.subr.bf16.mxu0 0
    %1376 = vmatpush2.bf16.msra.mxu0 0
    %1377 = vmatprep.subr.bf16.mxu0 0
    %1378 = vmatpush2.bf16.msra.mxu0 0
    %1379 = vmatprep.subr.bf16.mxu0 0
    %1380 = vmatpush2.bf16.msra.mxu0 0
    %1381 = vmatprep.subr.bf16.mxu0 0
    %1382 = vmatpush2.bf16.msra.mxu0 0
    %1383 = vmatprep.subr.bf16.mxu0 0
    %1384 = vmatpush2.bf16.msra.mxu0 0
    %1385 = vmatprep.subr.bf16.mxu0 0
    %1386 = vmatpush2.bf16.msra.mxu0 0
    %1387 = vmatprep.subr.bf16.mxu0 0
    %1388 = vmatpush2.bf16.msra.mxu0 0
    %1389 = vmatprep.mubr.bf16.mxu0 0
    %1390 = vmatmul.mubr.bf16.gmra.mxu0 %v1352
    %v1391 = vpop.f32.mrf.mxu0
    %v1392 = vadd.f32 0.0, %v1391
    %v1393 = vpop.f32.mrf.mxu0
    %v1394 = vpop.f32.mrf.mxu0
    %v1395 = vadd.f32 0.0, %v1394
    %v1396 = vpop.f32.mrf.mxu0
    %1397 = vmatprep.mubr.bf16.mxu0 0
    %1398 = vmatmul.mubr.bf16.gmra.mxu0 %v1355
    %v1399 = vpop.f32.mrf.mxu0
    %v1400 = vadd.f32 0.0, %v1399
    %v1401 = vpop.f32.mrf.mxu0
    %v1402 = vpop.f32.mrf.mxu0
    %v1403 = vpop.f32.mrf.mxu0
    %1404 = vdwg.mxu0
    %v1405 = vmul.f32 %v1392, %v406
    %v1406 = vmul.f32 %v1395, %v406
    %v1407 = vmul.f32 %v1400, %v406
    %v1408 = vadd.f32 %v1254, %v1405
    %v1409 = vadd.f32 %v1255, %v1406
    %v1410 = vadd.f32 %v1256, %v1407
    %v1411 = vpack.c.bf16 %v1409, %v1408
    %v1412 = vpack.c.bf16 %v1410, %v1410
    %s1413 = scalar_lea.vmem %s7, 16
    %v1414 = vld [vmem:[%s1413] sm:$0xf]
    %v1415 = vld [vmem:[%s1413 + $0x4] sm:$0xf]
    %v1416 = vld [vmem:[%s1413 + $0x8] sm:$0xf]
    %v1417 = vld [vmem:[%s1413 + $0xc] sm:$0xf]
    %v1422 = vunpack.c.l.b16 %v1414
    %v1423 = vunpack.c.l.b16 %v1415
    %v1424 = vunpack.c.l.b16 %v1416
    %v1425 = vunpack.c.l.b16 %v1417
    %v1426 = vpack.c.b16 %v1423, %v1422
    %v1427 = vpack.c.b16 %v1425, %v1424
    %v1431 = vsel %vm75, %v1411, 0
    %v1434 = vsel %vm75, %v1412, 0
    %1436 = vmatprep.subr.bf16.mxu0 0
    %1437 = vmatpush1.bf16.msra.mxu0 0
    %1438 = vmatprep.subr.bf16.mxu0 0
    %1439 = vmatpush1.bf16.msra.mxu0 0
    %1440 = vmatprep.subr.bf16.mxu0 0
    %1441 = vmatpush1.bf16.msra.mxu0 0
    %1442 = vmatprep.subr.bf16.mxu0 0
    %1443 = vmatpush1.bf16.msra.mxu0 0
    %1444 = vmatprep.subr.bf16.mxu0 0
    %1445 = vmatpush1.bf16.msra.mxu0 0
    %1446 = vmatprep.subr.bf16.mxu0 0
    %1447 = vmatpush1.bf16.msra.mxu0 0
    %1448 = vmatprep.subr.bf16.mxu0 0
    %1449 = vmatpush1.bf16.msra.mxu0 %v1427
    %1450 = vmatprep.subr.bf16.mxu0 0
    %1451 = vmatpush1.bf16.msra.mxu0 %v1426
    %1452 = vmatprep.subr.bf16.mxu0 0
    %1453 = vmatpush2.bf16.msra.mxu0 0
    %1454 = vmatprep.subr.bf16.mxu0 0
    %1455 = vmatpush2.bf16.msra.mxu0 0
    %1456 = vmatprep.subr.bf16.mxu0 0
    %1457 = vmatpush2.bf16.msra.mxu0 0
    %1458 = vmatprep.subr.bf16.mxu0 0
    %1459 = vmatpush2.bf16.msra.mxu0 0
    %1460 = vmatprep.subr.bf16.mxu0 0
    %1461 = vmatpush2.bf16.msra.mxu0 0
    %1462 = vmatprep.subr.bf16.mxu0 0
    %1463 = vmatpush2.bf16.msra.mxu0 0
    %1464 = vmatprep.subr.bf16.mxu0 0
    %1465 = vmatpush2.bf16.msra.mxu0 0
    %1466 = vmatprep.subr.bf16.mxu0 0
    %1467 = vmatpush2.bf16.msra.mxu0 0
    %1468 = vmatprep.mubr.bf16.mxu0 0
    %1469 = vmatmul.mubr.bf16.gmra.mxu0 %v1431
    %v1470 = vpop.f32.mrf.mxu0
    %v1471 = vadd.f32 0.0, %v1470
    %v1472 = vpop.f32.mrf.mxu0
    %v1473 = vpop.f32.mrf.mxu0
    %v1474 = vadd.f32 0.0, %v1473
    %v1475 = vpop.f32.mrf.mxu0
    %1476 = vmatprep.mubr.bf16.mxu0 0
    %1477 = vmatmul.mubr.bf16.gmra.mxu0 %v1434
    %v1478 = vpop.f32.mrf.mxu0
    %v1479 = vadd.f32 0.0, %v1478
    %v1480 = vpop.f32.mrf.mxu0
    %v1481 = vpop.f32.mrf.mxu0
    %v1482 = vpop.f32.mrf.mxu0
    %1483 = vdwg.mxu0
    %v1484 = vadd.f32 %v933, %v1471
    %v1485 = vadd.f32 %v934, %v1474
    %v1486 = vadd.f32 %v935, %v1479
    %s1487 = scalar_lea.vmem %s8, 1
    %v1488 = vld [vmem:[%s1487] sm:$0x1]
    %v1490 = vlaneseq
    %v1491 = vshrl.u32 %v1490, 7
    %v1492 = vsub.s32 0, %v1491
    %v1493 = vrot.slane %v1488, %v1492
    %v1495 = vadd.f32 %v1484, %v1493
    %v1496 = vadd.f32 %v1485, %v1493
    %v1497 = vadd.f32 %v1486, %v1493
    %s1498 = scalar_lea.vmem %s9, 1
    %v1499 = vld [vmem:[%s1498] sm:$0x1]
    %s1500 = scalar_lea.vmem %s10, 1
    %v1501 = vld [vmem:[%s1500] sm:$0x1]
    %v1502 = vsel %vm75, %v1495, 0.0
    %1503 = vadd.xlane.f32.xlu0 %v1502
    %v1504 = vpop.xlane.xlu0 %1503
    %v1505 = vsel %vm75, %v1496, 0.0
    %1506 = vadd.xlane.f32.xlu0 %v1505
    %v1507 = vpop.xlane.xlu0 %1506
    %v1508 = vsel %vm82, %v1497, 0.0
    %1509 = vadd.xlane.f32.xlu0 %v1508
    %v1510 = vpop.xlane.xlu0 %1509
    %v1511 = vmul.f32 %v1504, %v86
    %v1512 = vmul.f32 %v1507, %v86
    %v1513 = vmul.f32 %v1510, %v86
    %v1514 = vsub.f32 %v1495, %v1511
    %v1515 = vsub.f32 %v1496, %v1512
    %v1516 = vsub.f32 %v1497, %v1513
    %v1517 = vmul.f32 %v1514, %v1514
    %v1518 = vmul.f32 %v1515, %v1515
    %v1519 = vmul.f32 %v1516, %v1516
    %v1520 = vsel %vm75, %v1517, 0.0
    %1521 = vadd.xlane.f32.xlu0 %v1520
    %v1522 = vpop.xlane.xlu0 %1521
    %v1523 = vsel %vm75, %v1518, 0.0
    %1524 = vadd.xlane.f32.xlu0 %v1523
    %v1525 = vpop.xlane.xlu0 %1524
    %v1526 = vsel %vm82, %v1519, 0.0
    %1527 = vadd.xlane.f32.xlu0 %v1526
    %v1528 = vpop.xlane.xlu0 %1527
    %v1529 = vmul.f32 %v1522, %v86
    %v1530 = vmul.f32 %v1525, %v86
    %v1531 = vmul.f32 %v1528, %v86
    %v1532 = vadd.f32 %v1529, 1e-05
    %v1533 = vadd.f32 %v1530, 1e-05
    %v1534 = vadd.f32 %v1531, 1e-05
    %v1535 = vrsqrt.pop %v1532
    %v1536 = vrsqrt.pop %v1533
    %v1537 = vrsqrt.pop %v1534
    %v1538 = vmul.f32 %v1514, %v1535
    %v1539 = vmul.f32 %v1515, %v1536
    %v1540 = vmul.f32 %v1516, %v1537
    %v1542 = vlaneseq
    %v1543 = vshrl.u32 %v1542, 7
    %v1544 = vsub.s32 0, %v1543
    %v1545 = vrot.slane %v1499, %v1544
    %v1547 = vmul.f32 %v1538, %v1545
    %v1548 = vmul.f32 %v1539, %v1545
    %v1549 = vmul.f32 %v1540, %v1545
    %v1551 = vlaneseq
    %v1552 = vshrl.u32 %v1551, 7
    %v1553 = vsub.s32 0, %v1552
    %v1554 = vrot.slane %v1501, %v1553
    %v1556 = vadd.f32 %v1547, %v1554
    %v1557 = vadd.f32 %v1548, %v1554
    %v1558 = vadd.f32 %v1549, %v1554
    %v1559 = vpack.c.bf16 %v1557, %v1556
    %v1560 = vpack.c.bf16 %v1558, %v1558
    %s1561 = scalar_lea.vmem %s11, 16
    %v1562 = vld [vmem:[%s1561] sm:$0xf]
    %v1563 = vld [vmem:[%s1561 + $0x4] sm:$0xf]
    %v1564 = vld [vmem:[%s1561 + $0x8] sm:$0xf]
    %v1565 = vld [vmem:[%s1561 + $0xc] sm:$0xf]
    %s1566 = scalar_lea.vmem %s12, 1
    %v1567 = vld [vmem:[%s1566] sm:$0x1]
    %v1569 = vlaneseq
    %v1570 = vshrl.u32 %v1569, 7
    %v1571 = vsub.s32 0, %v1570
    %v1572 = vrot.slane %v1567, %v1571
    %v1578 = vunpack.c.l.b16 %v1562
    %v1579 = vunpack.c.l.b16 %v1563
    %v1580 = vunpack.c.l.b16 %v1564
    %v1581 = vunpack.c.l.b16 %v1565
    %v1582 = vpack.c.b16 %v1579, %v1578
    %v1583 = vpack.c.b16 %v1581, %v1580
    %v1587 = vsel %vm75, %v1559, 0
    %v1590 = vsel %vm75, %v1560, 0
    %1592 = vmatprep.subr.bf16.mxu0 0
    %1593 = vmatpush1.bf16.msra.mxu0 0
    %1594 = vmatprep.subr.bf16.mxu0 0
    %1595 = vmatpush1.bf16.msra.mxu0 0
    %1596 = vmatprep.subr.bf16.mxu0 0
    %1597 = vmatpush1.bf16.msra.mxu0 0
    %1598 = vmatprep.subr.bf16.mxu0 0
    %1599 = vmatpush1.bf16.msra.mxu0 0
    %1600 = vmatprep.subr.bf16.mxu0 0
    %1601 = vmatpush1.bf16.msra.mxu0 0
    %1602 = vmatprep.subr.bf16.mxu0 0
    %1603 = vmatpush1.bf16.msra.mxu0 0
    %1604 = vmatprep.subr.bf16.mxu0 0
    %1605 = vmatpush1.bf16.msra.mxu0 %v1583
    %1606 = vmatprep.subr.bf16.mxu0 0
    %1607 = vmatpush1.bf16.msra.mxu0 %v1582
    %1608 = vmatprep.subr.bf16.mxu0 0
    %1609 = vmatpush2.bf16.msra.mxu0 0
    %1610 = vmatprep.subr.bf16.mxu0 0
    %1611 = vmatpush2.bf16.msra.mxu0 0
    %1612 = vmatprep.subr.bf16.mxu0 0
    %1613 = vmatpush2.bf16.msra.mxu0 0
    %1614 = vmatprep.subr.bf16.mxu0 0
    %1615 = vmatpush2.bf16.msra.mxu0 0
    %1616 = vmatprep.subr.bf16.mxu0 0
    %1617 = vmatpush2.bf16.msra.mxu0 0
    %1618 = vmatprep.subr.bf16.mxu0 0
    %1619 = vmatpush2.bf16.msra.mxu0 0
    %1620 = vmatprep.subr.bf16.mxu0 0
    %1621 = vmatpush2.bf16.msra.mxu0 0
    %1622 = vmatprep.subr.bf16.mxu0 0
    %1623 = vmatpush2.bf16.msra.mxu0 0
    %1624 = vmatprep.mubr.bf16.mxu0 0
    %1625 = vmatmul.mubr.bf16.gmra.mxu0 %v1587
    %v1626 = vpop.f32.mrf.mxu0
    %v1627 = vadd.f32 %v1572, %v1626
    %v1628 = vpop.f32.mrf.mxu0
    %v1629 = vpop.f32.mrf.mxu0
    %v1630 = vadd.f32 %v1572, %v1629
    %v1631 = vpop.f32.mrf.mxu0
    %1632 = vmatprep.mubr.bf16.mxu0 0
    %1633 = vmatmul.mubr.bf16.gmra.mxu0 %v1590
    %v1634 = vpop.f32.mrf.mxu0
    %v1635 = vadd.f32 %v1572, %v1634
    %v1636 = vpop.f32.mrf.mxu0
    %v1637 = vpop.f32.mrf.mxu0
    %v1638 = vpop.f32.mrf.mxu0
    %1639 = vdwg.mxu0
    %v1640 = vmul.f32 %v1627, %v1627
    %v1641 = vmul.f32 %v1630, %v1630
    %v1642 = vmul.f32 %v1635, %v1635
    %v1643 = vmul.f32 %v1627, %v1640
    %v1644 = vmul.f32 %v1630, %v1641
    %v1645 = vmul.f32 %v1635, %v1642
    %v1646 = vmul.f32 %v1643, 0.044715
    %v1647 = vmul.f32 %v1644, 0.044715
    %v1648 = vmul.f32 %v1645, 0.044715
    %v1649 = vadd.f32 %v1627, %v1646
    %v1650 = vadd.f32 %v1630, %v1647
    %v1651 = vadd.f32 %v1635, %v1648
    %v1652 = vmul.f32 %v1649, 0.7978846
    %v1653 = vmul.f32 %v1650, 0.7978846
    %v1654 = vmul.f32 %v1651, 0.7978846
    %v1655 = vtanh.pop %v1652
    %v1656 = vtanh.pop %v1653
    %v1657 = vtanh.pop %v1654
    %v1658 = vadd.f32 %v1655, 1.0
    %v1659 = vadd.f32 %v1656, 1.0
    %v1660 = vadd.f32 %v1657, 1.0
    %v1661 = vmul.f32 %v1658, 0.5
    %v1662 = vmul.f32 %v1659, 0.5
    %v1663 = vmul.f32 %v1660, 0.5
    %v1664 = vmul.f32 %v1627, %v1661
    %v1665 = vmul.f32 %v1630, %v1662
    %v1666 = vmul.f32 %v1635, %v1663
    %v1667 = vpack.c.bf16 %v1665, %v1664
    %v1668 = vpack.c.bf16 %v1666, %v1666
    %s1669 = scalar_lea.vmem %s13, 64
    %v1670 = vld [vmem:[%s1669] sm:$0xf]
    %v1671 = vld [vmem:[%s1669 + $0x4] sm:$0xf]
    %v1672 = vld [vmem:[%s1669 + $0x8] sm:$0xf]
    %v1673 = vld [vmem:[%s1669 + $0xc] sm:$0xf]
    %v1674 = vld [vmem:[%s1669 + $0x10] sm:$0xf]
    %v1675 = vld [vmem:[%s1669 + $0x14] sm:$0xf]
    %v1676 = vld [vmem:[%s1669 + $0x18] sm:$0xf]
    %v1677 = vld [vmem:[%s1669 + $0x1c] sm:$0xf]
    %v1678 = vld [vmem:[%s1669 + $0x20] sm:$0xf]
    %v1679 = vld [vmem:[%s1669 + $0x24] sm:$0xf]
    %v1680 = vld [vmem:[%s1669 + $0x28] sm:$0xf]
    %v1681 = vld [vmem:[%s1669 + $0x2c] sm:$0xf]
    %v1682 = vld [vmem:[%s1669 + $0x30] sm:$0xf]
    %v1683 = vld [vmem:[%s1669 + $0x34] sm:$0xf]
    %v1684 = vld [vmem:[%s1669 + $0x38] sm:$0xf]
    %v1685 = vld [vmem:[%s1669 + $0x3c] sm:$0xf]
    %s1686 = scalar_lea.vmem %s14, 1
    %v1687 = vld [vmem:[%s1686] sm:$0x1]
    %v1689 = vlaneseq
    %v1690 = vshrl.u32 %v1689, 7
    %v1691 = vsub.s32 0, %v1690
    %v1692 = vrot.slane %v1687, %v1691
    %v1710 = vunpack.c.l.b16 %v1670
    %v1711 = vunpack.c.l.b16 %v1671
    %v1712 = vunpack.c.l.b16 %v1672
    %v1713 = vunpack.c.l.b16 %v1673
    %v1714 = vunpack.c.l.b16 %v1674
    %v1715 = vunpack.c.l.b16 %v1675
    %v1716 = vunpack.c.l.b16 %v1676
    %v1717 = vunpack.c.l.b16 %v1677
    %v1718 = vunpack.c.l.b16 %v1678
    %v1719 = vunpack.c.l.b16 %v1679
    %v1720 = vunpack.c.l.b16 %v1680
    %v1721 = vunpack.c.l.b16 %v1681
    %v1722 = vunpack.c.l.b16 %v1682
    %v1723 = vunpack.c.l.b16 %v1683
    %v1724 = vunpack.c.l.b16 %v1684
    %v1725 = vunpack.c.l.b16 %v1685
    %v1726 = vpack.c.b16 %v1711, %v1710
    %v1727 = vpack.c.b16 %v1713, %v1712
    %v1728 = vpack.c.b16 %v1715, %v1714
    %v1729 = vpack.c.b16 %v1717, %v1716
    %v1730 = vpack.c.b16 %v1719, %v1718
    %v1731 = vpack.c.b16 %v1721, %v1720
    %v1732 = vpack.c.b16 %v1723, %v1722
    %v1733 = vpack.c.b16 %v1725, %v1724
    %1742 = vmatprep.subr.bf16.mxu0 0
    %1743 = vmatpush1.bf16.msra.mxu0 %v1733
    %1744 = vmatprep.subr.bf16.mxu0 0
    %1745 = vmatpush1.bf16.msra.mxu0 %v1732
    %1746 = vmatprep.subr.bf16.mxu0 0
    %1747 = vmatpush1.bf16.msra.mxu0 %v1731
    %1748 = vmatprep.subr.bf16.mxu0 0
    %1749 = vmatpush1.bf16.msra.mxu0 %v1730
    %1750 = vmatprep.subr.bf16.mxu0 0
    %1751 = vmatpush1.bf16.msra.mxu0 %v1729
    %1752 = vmatprep.subr.bf16.mxu0 0
    %1753 = vmatpush1.bf16.msra.mxu0 %v1728
    %1754 = vmatprep.subr.bf16.mxu0 0
    %1755 = vmatpush1.bf16.msra.mxu0 %v1727
    %1756 = vmatprep.subr.bf16.mxu0 0
    %1757 = vmatpush1.bf16.msra.mxu0 %v1726
    %1758 = vmatprep.subr.bf16.mxu0 0
    %1759 = vmatpush2.bf16.msra.mxu0 0
    %1760 = vmatprep.subr.bf16.mxu0 0
    %1761 = vmatpush2.bf16.msra.mxu0 0
    %1762 = vmatprep.subr.bf16.mxu0 0
    %1763 = vmatpush2.bf16.msra.mxu0 0
    %1764 = vmatprep.subr.bf16.mxu0 0
    %1765 = vmatpush2.bf16.msra.mxu0 0
    %1766 = vmatprep.subr.bf16.mxu0 0
    %1767 = vmatpush2.bf16.msra.mxu0 0
    %1768 = vmatprep.subr.bf16.mxu0 0
    %1769 = vmatpush2.bf16.msra.mxu0 0
    %1770 = vmatprep.subr.bf16.mxu0 0
    %1771 = vmatpush2.bf16.msra.mxu0 0
    %1772 = vmatprep.subr.bf16.mxu0 0
    %1773 = vmatpush2.bf16.msra.mxu0 0
    %1774 = vmatprep.mubr.bf16.mxu0 0
    %1775 = vmatmul.mubr.bf16.gmra.mxu0 %v1667
    %v1776 = vpop.f32.mrf.mxu0
    %v1777 = vadd.f32 %v1692, %v1776
    %v1778 = vpop.f32.mrf.mxu0
    %v1779 = vpop.f32.mrf.mxu0
    %v1780 = vadd.f32 %v1692, %v1779
    %v1781 = vpop.f32.mrf.mxu0
    %1782 = vmatprep.mubr.bf16.mxu0 0
    %1783 = vmatmul.mubr.bf16.gmra.mxu0 %v1668
    %v1784 = vpop.f32.mrf.mxu0
    %v1785 = vadd.f32 %v1692, %v1784
    %v1786 = vpop.f32.mrf.mxu0
    %v1787 = vpop.f32.mrf.mxu0
    %v1788 = vpop.f32.mrf.mxu0
    %1789 = vdwg.mxu0
    %v1790 = vadd.f32 %v1495, %v1777
    %v1791 = vadd.f32 %v1496, %v1780
    %v1792 = vadd.f32 %v1497, %v1785
    %v1793 = vld [vmem:[%s15] sm:$0x1]
    %v1794 = vld [vmem:[%s16] sm:$0x1]
    %v1795 = vsel %vm75, %v1790, 0.0
    %1796 = vadd.xlane.f32.xlu0 %v1795
    %v1797 = vpop.xlane.xlu0 %1796
    %v1798 = vsel %vm75, %v1791, 0.0
    %1799 = vadd.xlane.f32.xlu0 %v1798
    %v1800 = vpop.xlane.xlu0 %1799
    %v1801 = vsel %vm82, %v1792, 0.0
    %1802 = vadd.xlane.f32.xlu0 %v1801
    %v1803 = vpop.xlane.xlu0 %1802
    %v1804 = vmul.f32 %v1797, %v86
    %v1805 = vmul.f32 %v1800, %v86
    %v1806 = vmul.f32 %v1803, %v86
    %v1807 = vsub.f32 %v1790, %v1804
    %v1808 = vsub.f32 %v1791, %v1805
    %v1809 = vsub.f32 %v1792, %v1806
    %v1810 = vmul.f32 %v1807, %v1807
    %v1811 = vmul.f32 %v1808, %v1808
    %v1812 = vmul.f32 %v1809, %v1809
    %v1813 = vsel %vm75, %v1810, 0.0
    %1814 = vadd.xlane.f32.xlu0 %v1813
    %v1815 = vpop.xlane.xlu0 %1814
    %v1816 = vsel %vm75, %v1811, 0.0
    %1817 = vadd.xlane.f32.xlu0 %v1816
    %v1818 = vpop.xlane.xlu0 %1817
    %v1819 = vsel %vm82, %v1812, 0.0
    %1820 = vadd.xlane.f32.xlu0 %v1819
    %v1821 = vpop.xlane.xlu0 %1820
    %v1822 = vmul.f32 %v1815, %v86
    %v1823 = vmul.f32 %v1818, %v86
    %v1824 = vmul.f32 %v1821, %v86
    %v1825 = vadd.f32 %v1822, 1e-05
    %v1826 = vadd.f32 %v1823, 1e-05
    %v1827 = vadd.f32 %v1824, 1e-05
    %v1828 = vrsqrt.pop %v1825
    %v1829 = vrsqrt.pop %v1826
    %v1830 = vrsqrt.pop %v1827
    %v1831 = vmul.f32 %v1807, %v1828
    %v1832 = vmul.f32 %v1808, %v1829
    %v1833 = vmul.f32 %v1809, %v1830
    %v1835 = vlaneseq
    %v1836 = vshrl.u32 %v1835, 7
    %v1837 = vsub.s32 0, %v1836
    %v1838 = vrot.slane %v1793, %v1837
    %v1840 = vmul.f32 %v1831, %v1838
    %v1841 = vmul.f32 %v1832, %v1838
    %v1842 = vmul.f32 %v1833, %v1838
    %v1844 = vlaneseq
    %v1845 = vshrl.u32 %v1844, 7
    %v1846 = vsub.s32 0, %v1845
    %v1847 = vrot.slane %v1794, %v1846
    %v1849 = vadd.f32 %v1840, %v1847
    %v1850 = vadd.f32 %v1841, %v1847
    %v1851 = vadd.f32 %v1842, %v1847
    %v1852 = vpack.c.bf16 %v1850, %v1849
    %v1853 = vpack.c.bf16 %v1851, %v1851
    %v1854 = vld [vmem:[%s17] sm:$0xf]
    %v1855 = vld [vmem:[%s17 + $0x4] sm:$0xf]
    %v1856 = vld [vmem:[%s17 + $0x8] sm:$0xf]
    %v1857 = vld [vmem:[%s17 + $0xc] sm:$0xf]
    %v1862 = vunpack.c.l.b16 %v1854
    %v1863 = vunpack.c.l.b16 %v1855
    %v1864 = vunpack.c.l.b16 %v1856
    %v1865 = vunpack.c.l.b16 %v1857
    %v1866 = vpack.c.b16 %v1863, %v1862
    %v1867 = vpack.c.b16 %v1865, %v1864
    %v1871 = vsel %vm75, %v1852, 0
    %v1874 = vsel %vm75, %v1853, 0
    %1876 = vmatprep.subr.bf16.mxu0 0
    %1877 = vmatpush1.bf16.msra.mxu0 0
    %1878 = vmatprep.subr.bf16.mxu0 0
    %1879 = vmatpush1.bf16.msra.mxu0 0
    %1880 = vmatprep.subr.bf16.mxu0 0
    %1881 = vmatpush1.bf16.msra.mxu0 0
    %1882 = vmatprep.subr.bf16.mxu0 0
    %1883 = vmatpush1.bf16.msra.mxu0 0
    %1884 = vmatprep.subr.bf16.mxu0 0
    %1885 = vmatpush1.bf16.msra.mxu0 0
    %1886 = vmatprep.subr.bf16.mxu0 0
    %1887 = vmatpush1.bf16.msra.mxu0 0
    %1888 = vmatprep.subr.bf16.mxu0 0
    %1889 = vmatpush1.bf16.msra.mxu0 %v1867
    %1890 = vmatprep.subr.bf16.mxu0 0
    %1891 = vmatpush1.bf16.msra.mxu0 %v1866
    %1892 = vmatprep.subr.bf16.mxu0 0
    %1893 = vmatpush2.bf16.msra.mxu0 0
    %1894 = vmatprep.subr.bf16.mxu0 0
    %1895 = vmatpush2.bf16.msra.mxu0 0
    %1896 = vmatprep.subr.bf16.mxu0 0
    %1897 = vmatpush2.bf16.msra.mxu0 0
    %1898 = vmatprep.subr.bf16.mxu0 0
    %1899 = vmatpush2.bf16.msra.mxu0 0
    %1900 = vmatprep.subr.bf16.mxu0 0
    %1901 = vmatpush2.bf16.msra.mxu0 0
    %1902 = vmatprep.subr.bf16.mxu0 0
    %1903 = vmatpush2.bf16.msra.mxu0 0
    %1904 = vmatprep.subr.bf16.mxu0 0
    %1905 = vmatpush2.bf16.msra.mxu0 0
    %1906 = vmatprep.subr.bf16.mxu0 0
    %1907 = vmatpush2.bf16.msra.mxu0 0
    %1908 = vmatprep.mubr.bf16.mxu0 0
    %1909 = vmatmul.mubr.bf16.gmra.mxu0 %v1871
    %v1910 = vpop.f32.mrf.mxu0
    %v1911 = vadd.f32 0.0, %v1910
    %v1912 = vpop.f32.mrf.mxu0
    %v1913 = vpop.f32.mrf.mxu0
    %v1914 = vadd.f32 0.0, %v1913
    %v1915 = vpop.f32.mrf.mxu0
    %1916 = vmatprep.mubr.bf16.mxu0 0
    %1917 = vmatmul.mubr.bf16.gmra.mxu0 %v1874
    %v1918 = vpop.f32.mrf.mxu0
    %v1919 = vadd.f32 0.0, %v1918
    %v1920 = vpop.f32.mrf.mxu0
    %v1921 = vpop.f32.mrf.mxu0
    %v1922 = vpop.f32.mrf.mxu0
    %1923 = vdwg.mxu0
    %1924 = vmax.xlane.f32.xlu0 %v1911
    %v1925 = vpop.xlane.xlu0 %1924
    %1926 = vmax.xlane.f32.xlu0 %v1914
    %v1927 = vpop.xlane.xlu0 %1926
    %vm1928 = vcmask 1041408
    %v1929 = vsel %vm1928, %v1919, -inf
    %1930 = vmax.xlane.f32.xlu0 %v1929
    %v1931 = vpop.xlane.xlu0 %1930
    %v1932 = vsub.f32 %v1911, %v1925
    %v1933 = vsub.f32 %v1914, %v1927
    %v1934 = vsub.f32 %v1919, %v1931
    %v1935 = vmul.f32 %v1932, 1.442695
    %v1936 = vpow.pop %v1935
    %v1937 = vmul.f32 %v1933, 1.442695
    %v1938 = vpow.pop %v1937
    %v1939 = vmul.f32 %v1934, 1.442695
    %v1940 = vpow.pop %v1939
    %v1941 = vld [vmem:[%s18] sm:$0x1]
    %v1943 = vlaneseq
    %v1944 = vshrl.u32 %v1943, 7
    %v1945 = vsub.s32 0, %v1944
    %v1946 = vrot.slane %v1941, %v1945
    %v1948 = vmul.f32 %v1936, %v1946
    %v1949 = vmul.f32 %v1938, %v1946
    %v1950 = vmul.f32 %v1940, %v1946
    %1951 = vadd.xlane.f32.xlu0 %v1948
    %v1952 = vpop.xlane.xlu0 %1951
    %1953 = vadd.xlane.f32.xlu0 %v1949
    %v1954 = vpop.xlane.xlu0 %1953
    %v1955 = vsel %vm1928, %v1950, 0.0
    %1956 = vadd.xlane.f32.xlu0 %v1955
    %v1957 = vpop.xlane.xlu0 %1956
    %v1958 = vrcp.pop %v1952
    %v1959 = vmul.f32 %v1948, %v1958
    %v1960 = vrcp.pop %v1954
    %v1961 = vmul.f32 %v1949, %v1960
    %v1962 = vrcp.pop %v1957
    %v1963 = vmul.f32 %v1950, %v1962
    %1964 = vst [vmem:[#allocation2] sm:$0xff] %v1959
    %1965 = vst [vmem:[#allocation2 + $0x8] sm:$0xff] %v1961
    %1966 = vst [vmem:[#allocation2 + $0x10] sm:$0x3] %v1963
    // Predicated region
    $region78: #{tpu_custom_call.1} parent=1 // pred_check
      _
    $region79: #{tpu_custom_call.1} parent=1 // pred_check_branch
      %1968 = sbr.rel (0) target = $region81
    $region80: #{tpu_custom_call.1} parent=1 // pred_region
      %s1970 = ssub.s32 384, 384
      %1971 = vsyncadd [#allocation3], %s1970
      %s1972 = sshll.u32 [#allocation2], 4
      %s1973 = int_to_ptr.vmem [resolvable:$true] %s1972
      %1978 = dma.vmem_to_hbm [thread:$0]  %s1973, 384, %s19, [#allocation3], 128, 128, 8
    $region81: #{tpu_custom_call.1} parent=1 // pred_fallthru
      _
    // Predicated region
    $region82: #{tpu_custom_call.1} parent=1 // pred_check
      _
    $region83: #{tpu_custom_call.1} parent=1 // pred_check_branch
      %1980 = sbr.rel (0) target = $region85
    $region84: #{tpu_custom_call.1} parent=1 // pred_region
      %1981 = dma.done [#allocation3], 384
    $region85: #{tpu_custom_call.1} parent=1 // pred_fallthru
      _
    %1982 = vsyncpa [#allocation3], 1

</llo_original>
